<compile_context>
chip_gen: v7x
topology: tpu7x:2x2x1
jax: 0.10.0
libtpu: 0.0.40
codegen_flags: <defaults>
</compile_context>

<pallas_src>
import functools

import jax
import jax.numpy as jnp
import numpy as np
from jax import lax
from jax.experimental import pallas as pl
from jax.experimental.pallas import tpu as pltpu

EPS = 1e-5


def _round_up(x, m):
    return (x + m - 1) // m * m


# ------------------------------ kernel helpers ------------------------------ #
def _conv3(t, w, lane_stride, d, Mp):
    """3-tap 'same' conv along one spatial direction.

    Expressed as 3 accumulated (C2,C2)x(C2,Mp) MXU dots (no im2col concat).
    `t` carries a >= d-wide ring of zeros around every image, so an unmasked
    lane-rotate reads exactly the zero padding for every *interior* output
    position; pad positions are re-zeroed by the caller with one hoisted mask
    multiply.  MXU operands are bf16, accumulation is f32.
    """
    acc = jnp.dot(w[1], t.astype(jnp.bfloat16),
                  preferred_element_type=jnp.float32)
    for k in (0, 2):
        s = (k - 1) * d * lane_stride                 # tap offset in lanes
        tap = pltpu.roll(t, (-s) % Mp, axis=1)        # out[i] = t[i + s]
        acc = acc + jnp.dot(w[k], tap.astype(jnp.bfloat16),
                            preferred_element_type=jnp.float32)
    return acc


def _conv_pair(x, wa, wb, s1, s2, d, mask, Mp):
    """relu(conv along dir1) -> conv along dir2; re-zero the pad ring after
    each conv so the next conv's zero-padding semantics stay exact."""
    t = jnp.maximum(_conv3(x, wa, s1, d, Mp) * mask, 0.0)
    return _conv3(t, wb, s2, d, Mp) * mask


def _load_w(ref):
    return ref[...].astype(jnp.bfloat16)


def _write_stats(stats_ref, u1, u2):
    # per-image, per-channel partial sums for exact batch statistics (f32)
    stats_ref[:, 0:1] = jnp.sum(u1, axis=-1, keepdims=True)
    stats_ref[:, 1:2] = jnp.sum(u1 * u1, axis=-1, keepdims=True)
    stats_ref[:, 2:3] = jnp.sum(u2, axis=-1, keepdims=True)
    stats_ref[:, 3:4] = jnp.sum(u2 * u2, axis=-1, keepdims=True)


# --------------------------------- kernels ----------------------------------- #
def _stage1_kernel(Wp,
                   x1_ref, x2_ref, mask_ref,
                   w1a_ref, w1b_ref, w2a_ref, w2b_ref,
                   u1_ref, u2_ref, stats_ref):
    Mp = x1_ref.shape[-1]
    mask = mask_ref[...]
    w1a, w1b = _load_w(w1a_ref), _load_w(w1b_ref)
    w2a, w2b = _load_w(w2a_ref), _load_w(w2b_ref)
    # branch1 kernel_size=(3,1): conv along H (stride Wp lanes) then along W.
    u1 = _conv_pair(x1_ref[...], w1a, w1b, Wp, 1, 1, mask, Mp)
    # branch2 kernel_size=(1,3): conv along W then along H.
    u2 = _conv_pair(x2_ref[...], w2a, w2b, 1, Wp, 1, mask, Mp)
    u1_ref[...] = u1
    u2_ref[...] = u2
    _write_stats(stats_ref, u1, u2)


def _stage2_kernel(Wp, dil,
                   u1_ref, u2_ref, mask_ref,
                   sc1_ref, sh1_ref, sc2_ref, sh2_ref,
                   w1c_ref, w1d_ref, w2c_ref, w2d_ref,
                   v1_ref, v2_ref, stats_ref):
    Mp = u1_ref.shape[-1]
    mask = mask_ref[...]
    w1c, w1d = _load_w(w1c_ref), _load_w(w1d_ref)
    w2c, w2d = _load_w(w2c_ref), _load_w(w2d_ref)
    # BN1 (pre-folded scale/shift) + relu, re-zero pad ring before the convs.
    a1 = jnp.maximum(u1_ref[...] * sc1_ref[...] + sh1_ref[...], 0.0) * mask
    a2 = jnp.maximum(u2_ref[...] * sc2_ref[...] + sh2_ref[...], 0.0) * mask
    v1 = _conv_pair(a1, w1c, w1d, Wp, 1, dil, mask, Mp)
    v2 = _conv_pair(a2, w2c, w2d, 1, Wp, dil, mask, Mp)
    v1_ref[...] = v1
    v2_ref[...] = v2
    _write_stats(stats_ref, v1, v2)


def _stage3_kernel(x1_ref, x2_ref, v1_ref, v2_ref,
                   sc1_ref, sh1_ref, sc2_ref, sh2_ref,
                   r1_ref, r2_ref):
    # BN2 + relu -> residual add -> relu.  Channel shuffle happens in the
    # wrapper (two separate lane-dense outputs, no in-kernel sublane interleave).
    y1 = jnp.maximum(v1_ref[...] * sc1_ref[...] + sh1_ref[...], 0.0)
    y2 = jnp.maximum(v2_ref[...] * sc2_ref[...] + sh2_ref[...], 0.0)
    r1_ref[...] = jnp.maximum(x1_ref[...] + y1, 0.0)
    r2_ref[...] = jnp.maximum(x2_ref[...] + y2, 0.0)


# -------------------------------- wrapper ------------------------------------ #
def ss_nbt(x, p, dilated):
    N, C, H, W = x.shape
    assert C % 2 == 0
    C2 = C // 2
    assert 0 < dilated < min(H, W)

    P = dilated                        # zero ring wide enough for every tap
    Hp, Wp = H + 2 * P, W + 2 * P
    Mp = _round_up(Hp * Wp, 128)       # lane-dense last dim (unmasked stores)
    count = float(N * H * W)

    # ---- layout plumbing (XLA): NCHW -> zero-ringed, lane-flattened slabs ----
    xpad = jnp.pad(x, ((0, 0), (0, 0), (P, P), (P, P)))
    x_flat = jnp.pad(xpad.reshape(N, C, Hp * Wp),
                     ((0, 0), (0, 0), (0, Mp - Hp * Wp)))
    x1p = x_flat[:, :C2]
    x2p = x_flat[:, C2:]

    # Interior-validity mask (hoisted to the host; resident in VMEM).
    lane = np.arange(Mp)
    hp_i, wp_i = lane // Wp, lane % Wp
    valid = ((hp_i >= P) & (hp_i < P + H) & (wp_i >= P) & (wp_i < P + W)
             & (lane < Hp * Wp))
    mask = jnp.asarray(valid.astype(np.float32)).reshape(1, Mp)

    def wtap(w):    # (C_out, C_in, 3) -> (3, C_out, C_in); w[k] is one tap
        return jnp.transpose(w, (2, 0, 1))

    w1a, w1b, w1c, w1d = (wtap(p[k]) for k in ('b1w1', 'b1w2', 'b1w3', 'b1w4'))
    w2a, w2b, w2c, w2d = (wtap(p[k]) for k in ('b2w1', 'b2w2', 'b2w3', 'b2w4'))

    # ---- specs ----
    img = pl.BlockSpec((None, C2, Mp), lambda n: (n, 0, 0))
    stats_spec = pl.BlockSpec((None, C2, 4), lambda n: (n, 0, 0))

    def resident(a):   # constant index map: stays VMEM resident, no re-fetch
        nd = a.ndim
        return pl.BlockSpec(a.shape, lambda *_: (0,) * nd)

    cparams = pltpu.CompilerParams(
        dimension_semantics=("parallel",),          # megacore split on v7x
        vmem_limit_bytes=32 * 1024 * 1024)          # explicit VMEM budget

    img_out = jax.ShapeDtypeStruct((N, C2, Mp), jnp.float32)
    stats_out = jax.ShapeDtypeStruct((N, C2, 4), jnp.float32)

    # ---- stage 1: non-dilated conv pair + BN1 partial sums ----
    u1, u2, stats1 = pl.pallas_call(
        functools.partial(_stage1_kernel, Wp),
        grid=(N,),
        in_specs=[img, img, resident(mask),
                  resident(w1a), resident(w1b), resident(w2a), resident(w2b)],
        out_specs=[img, img, stats_spec],
        out_shape=[img_out, img_out, stats_out],
        compiler_params=cparams,
    )(x1p, x2p, mask, w1a, w1b, w2a, w2b)

    def bn_affine(s, q, gamma, beta):
        # exact training-mode batch stats (biased variance), folded to y=x*sc+sh
        mean = s / count
        var = q / count - mean * mean
        scale = gamma * lax.rsqrt(var + EPS)
        shift = beta - mean * scale
        return scale.reshape(C2, 1), shift.reshape(C2, 1)

    t1 = jnp.sum(stats1, axis=0)
    sc11, sh11 = bn_affine(t1[:, 0], t1[:, 1], p['b1g1'], p['b1b1'])
    sc12, sh12 = bn_affine(t1[:, 2], t1[:, 3], p['b2g1'], p['b2b1'])

    # ---- stage 2: BN1-normalize + dilated conv pair + BN2 partial sums ----
    v1, v2, stats2 = pl.pallas_call(
        functools.partial(_stage2_kernel, Wp, dilated),
        grid=(N,),
        in_specs=[img, img, resident(mask),
                  resident(sc11), resident(sh11), resident(sc12), resident(sh12),
                  resident(w1c), resident(w1d), resident(w2c), resident(w2d)],
        out_specs=[img, img, stats_spec],
        out_shape=[img_out, img_out, stats_out],
        compiler_params=cparams,
    )(u1, u2, mask, sc11, sh11, sc12, sh12, w1c, w1d, w2c, w2d)

    t2 = jnp.sum(stats2, axis=0)
    sc21, sh21 = bn_affine(t2[:, 0], t2[:, 1], p['b1g2'], p['b1b2'])
    sc22, sh22 = bn_affine(t2[:, 2], t2[:, 3], p['b2g2'], p['b2b2'])

    # ---- stage 3: BN2-normalize + residual + relu ----
    r1, r2 = pl.pallas_call(
        _stage3_kernel,
        grid=(N,),
        in_specs=[img, img, img, img,
                  resident(sc21), resident(sh21), resident(sc22), resident(sh22)],
        out_specs=[img, img],
        out_shape=[img_out, img_out],
        compiler_params=cparams,
    )(x1p, x2p, v1, v2, sc21, sh21, sc22, sh22)

    # ---- un-plumb: strip pads, interleave branches (= channel_shuffle g=2) ----
    def unpad(r):
        return r[:, :, :Hp * Wp].reshape(N, C2, Hp, Wp)[:, :, P:P + H, P:P + W]

    out = jnp.stack([unpad(r1), unpad(r2)], axis=2).reshape(N, C, H, W)
    return out.astype(x.dtype)


# ------------------------------ pure-JAX reference -------------------------- #
def _conv_ref(x, w4d, dil, mxu_bf16):
    if mxu_bf16:   # same algorithm as the kernel: bf16 MXU operands, f32 acc
        x = x.astype(jnp.bfloat16)
        w4d = w4d.astype(jnp.bfloat16)
    kh, kw = w4d.shape[2], w4d.shape[3]
    ph, pw = (kh // 2) * dil, (kw // 2) * dil
    return lax.conv_general_dilated(
        x, w4d, window_strides=(1, 1), padding=((ph, ph), (pw, pw)),
        rhs_dilation=(dil, dil), dimension_numbers=('NCHW', 'OIHW', 'NCHW'),
        preferred_element_type=jnp.float32,
        precision=jax.lax.Precision.HIGHEST)


def _bn_ref(x, g, b):
    m = x.mean(axis=(0, 2, 3), keepdims=True)
    v = ((x - m) ** 2).mean(axis=(0, 2, 3), keepdims=True)
    return (x - m) / jnp.sqrt(v + EPS) * g.reshape(1, -1, 1, 1) \
        + b.reshape(1, -1, 1, 1)


def _branch_ref(x, wA, wB, wAd, wBd, g1, b1, g2, b2, dil, mxu_bf16):
    t = jax.nn.relu(_conv_ref(x, wA, 1, mxu_bf16))
    t = _conv_ref(t, wB, 1, mxu_bf16)
    t = jax.nn.relu(_bn_ref(t, g1, b1))
    t = jax.nn.relu(_conv_ref(t, wAd, dil, mxu_bf16))
    t = _conv_ref(t, wBd, dil, mxu_bf16)
    t = jax.nn.relu(_bn_ref(t, g2, b2))
    return t


def ss_nbt_ref(x, p, dilated, mxu_bf16=False):
    N, C, H, W = x.shape
    C2 = C // 2
    x1, x2 = x[:, :C2], x[:, C2:]
    y1 = _branch_ref(
        x1,
        p['b1w1'].reshape(C2, C2, 3, 1), p['b1w2'].reshape(C2, C2, 1, 3),
        p['b1w3'].reshape(C2, C2, 3, 1), p['b1w4'].reshape(C2, C2, 1, 3),
        p['b1g1'], p['b1b1'], p['b1g2'], p['b1b2'], dilated, mxu_bf16)
    y2 = _branch_ref(
        x2,
        p['b2w1'].reshape(C2, C2, 1, 3), p['b2w2'].reshape(C2, C2, 3, 1),
        p['b2w3'].reshape(C2, C2, 1, 3), p['b2w4'].reshape(C2, C2, 3, 1),
        p['b2g1'], p['b2b1'], p['b2g2'], p['b2b2'], dilated, mxu_bf16)
    y = jax.nn.relu(x + jnp.concatenate([y1, y2], axis=1))
    y = y.reshape(N, 2, C2, H, W).transpose(0, 2, 1, 3, 4).reshape(N, C, H, W)
    return y


# ----------------------------------- main ----------------------------------- #
def init_params(key, C2):
    ks = jax.random.split(key, 16)
    p = {}
    wnames = ['b1w1', 'b1w2', 'b1w3', 'b1w4', 'b2w1', 'b2w2', 'b2w3', 'b2w4']
    for i, n in enumerate(wnames):
        p[n] = 0.3 * jax.random.normal(ks[i], (C2, C2, 3), jnp.float32)
    gnames = ['b1g1', 'b1g2', 'b2g1', 'b2g2']
    bnames = ['b1b1', 'b1b2', 'b2b1', 'b2b2']
    for i, n in enumerate(gnames):
        p[n] = 1.0 + 0.1 * jax.random.normal(ks[8 + i], (C2,), jnp.float32)
    for i, n in enumerate(bnames):
        p[n] = 0.1 * jax.random.normal(ks[12 + i], (C2,), jnp.float32)
    return p


if __name__ == "__main__":
    channels, dilated = 4, 2
    N, H, W = 2, 16, 16
    C2 = channels // 2

    key = jax.random.PRNGKey(0)
    kx, kp = jax.random.split(key)
    x = jax.random.normal(kx, (N, channels, H, W), jnp.float32)
    p = init_params(kp, C2)

    out = jax.block_until_ready(ss_nbt(x, p, dilated))

    # Structural check: reference running the same algorithm (bf16 MXU
    # operands, f32 accumulation / BN) -> tight tolerance.
    ref_alg = ss_nbt_ref(x, p, dilated, mxu_bf16=True)
    np.testing.assert_allclose(np.asarray(out), np.asarray(ref_alg),
                               rtol=1e-3, atol=1e-3)

    # Fidelity check vs the pure-f32 module semantics: DELIBERATELY loosened
    # (per perf review) to cover bf16 MXU-operand rounding across 4 convs.
    ref_f32 = ss_nbt_ref(x, p, dilated, mxu_bf16=False)
    np.testing.assert_allclose(np.asarray(out), np.asarray(ref_f32),
                               rtol=5e-2, atol=5e-2)

    print("KERNEL_OK")
</pallas_src>

<mosaic_0001>
module attributes {stable_mosaic.version = 11 : i64} {
  func.func @_stage1_kernel(%arg0: i32, %arg1: memref<1x2x512xf32, #tpu.memory_space<vmem>>, %arg2: memref<1x2x512xf32, #tpu.memory_space<vmem>>, %arg3: memref<1x512xf32, #tpu.memory_space<vmem>>, %arg4: memref<3x2x2xf32, #tpu.memory_space<vmem>>, %arg5: memref<3x2x2xf32, #tpu.memory_space<vmem>>, %arg6: memref<3x2x2xf32, #tpu.memory_space<vmem>>, %arg7: memref<3x2x2xf32, #tpu.memory_space<vmem>>, %arg8: memref<1x2x512xf32, #tpu.memory_space<vmem>>, %arg9: memref<1x2x512xf32, #tpu.memory_space<vmem>>, %arg10: memref<1x2x4xf32, #tpu.memory_space<vmem>>) attributes {dimension_semantics = [#tpu.dimension_semantics<parallel>], iteration_bounds = array<i64: 2>, scalar_prefetch = 0 : i64, scratch_operands = 0 : i64, tpu.core_type = #tpu.core_type<tc>, window_params = [{transform_indices = @transform_0, window_bounds = array<i64: 1, 2, 512>}, {transform_indices = @transform_1, window_bounds = array<i64: 1, 2, 512>}, {pipeline_mode = #tpu.pipeline_mode<synchronous>, transform_indices = @transform_2, window_bounds = array<i64: 1, 512>}, {pipeline_mode = #tpu.pipeline_mode<synchronous>, transform_indices = @transform_3, window_bounds = array<i64: 3, 2, 2>}, {pipeline_mode = #tpu.pipeline_mode<synchronous>, transform_indices = @transform_4, window_bounds = array<i64: 3, 2, 2>}, {pipeline_mode = #tpu.pipeline_mode<synchronous>, transform_indices = @transform_5, window_bounds = array<i64: 3, 2, 2>}, {pipeline_mode = #tpu.pipeline_mode<synchronous>, transform_indices = @transform_6, window_bounds = array<i64: 3, 2, 2>}, {transform_indices = @transform_7, window_bounds = array<i64: 1, 2, 512>}, {transform_indices = @transform_8, window_bounds = array<i64: 1, 2, 512>}, {transform_indices = @transform_9, window_bounds = array<i64: 1, 2, 4>}]} {
    %c0 = arith.constant 0 : index
    %c0_0 = arith.constant 0 : index
    %0 = vector.load %arg3[%c0, %c0_0] : memref<1x512xf32, #tpu.memory_space<vmem>>, vector<1x512xf32>
    %c0_1 = arith.constant 0 : index
    %c0_2 = arith.constant 0 : index
    %c0_3 = arith.constant 0 : index
    %1 = vector.load %arg4[%c0_1, %c0_2, %c0_3] : memref<3x2x2xf32, #tpu.memory_space<vmem>>, vector<3x2x2xf32>
    %2 = arith.truncf %1 : vector<3x2x2xf32> to vector<3x2x2xbf16>
    %c0_4 = arith.constant 0 : index
    %c0_5 = arith.constant 0 : index
    %c0_6 = arith.constant 0 : index
    %3 = vector.load %arg5[%c0_4, %c0_5, %c0_6] : memref<3x2x2xf32, #tpu.memory_space<vmem>>, vector<3x2x2xf32>
    %4 = arith.truncf %3 : vector<3x2x2xf32> to vector<3x2x2xbf16>
    %c0_7 = arith.constant 0 : index
    %c0_8 = arith.constant 0 : index
    %c0_9 = arith.constant 0 : index
    %5 = vector.load %arg6[%c0_7, %c0_8, %c0_9] : memref<3x2x2xf32, #tpu.memory_space<vmem>>, vector<3x2x2xf32>
    %6 = arith.truncf %5 : vector<3x2x2xf32> to vector<3x2x2xbf16>
    %c0_10 = arith.constant 0 : index
    %c0_11 = arith.constant 0 : index
    %c0_12 = arith.constant 0 : index
    %7 = vector.load %arg7[%c0_10, %c0_11, %c0_12] : memref<3x2x2xf32, #tpu.memory_space<vmem>>, vector<3x2x2xf32>
    %8 = arith.truncf %7 : vector<3x2x2xf32> to vector<3x2x2xbf16>
    %c0_13 = arith.constant 0 : index
    %c0_14 = arith.constant 0 : index
    %c0_15 = arith.constant 0 : index
    %9 = vector.load %arg1[%c0_13, %c0_14, %c0_15] : memref<1x2x512xf32, #tpu.memory_space<vmem>>, vector<1x2x512xf32>
    %10 = vector.shape_cast %9 : vector<1x2x512xf32> to vector<2x512xf32>
    %11 = vector.extract_strided_slice %2 {offsets = [1, 0, 0], sizes = [1, 2, 2], strides = [1, 1, 1]} : vector<3x2x2xbf16> to vector<1x2x2xbf16>
    %12 = vector.shape_cast %11 : vector<1x2x2xbf16> to vector<2x2xbf16>
    %13 = arith.truncf %10 : vector<2x512xf32> to vector<2x512xbf16>
    %cst = arith.constant dense<0.000000e+00> : vector<2x512xf32>
    %14 = tpu.matmul %12, %13, %cst {dimension_numbers = #tpu.dot_dimension_numbers<[1], [0], [0], [1], [0, 0, 1, 1], [], []>} : vector<2x2xbf16>, vector<2x512xbf16>, vector<2x512xf32> -> vector<2x512xf32>
    %c20_i32 = arith.constant 20 : i32
    %15 = tpu.dynamic_rotate %10 by %c20_i32 dim 1 : vector<2x512xf32>, i32 -> vector<2x512xf32>
    %16 = vector.extract_strided_slice %2 {offsets = [0, 0, 0], sizes = [1, 2, 2], strides = [1, 1, 1]} : vector<3x2x2xbf16> to vector<1x2x2xbf16>
    %17 = vector.shape_cast %16 : vector<1x2x2xbf16> to vector<2x2xbf16>
    %18 = arith.truncf %15 : vector<2x512xf32> to vector<2x512xbf16>
    %cst_16 = arith.constant dense<0.000000e+00> : vector<2x512xf32>
    %19 = tpu.matmul %17, %18, %cst_16 {dimension_numbers = #tpu.dot_dimension_numbers<[1], [0], [0], [1], [0, 0, 1, 1], [], []>} : vector<2x2xbf16>, vector<2x512xbf16>, vector<2x512xf32> -> vector<2x512xf32>
    %20 = arith.addf %14, %19 : vector<2x512xf32>
    %c492_i32 = arith.constant 492 : i32
    %21 = tpu.dynamic_rotate %10 by %c492_i32 dim 1 : vector<2x512xf32>, i32 -> vector<2x512xf32>
    %22 = vector.extract_strided_slice %2 {offsets = [2, 0, 0], sizes = [1, 2, 2], strides = [1, 1, 1]} : vector<3x2x2xbf16> to vector<1x2x2xbf16>
    %23 = vector.shape_cast %22 : vector<1x2x2xbf16> to vector<2x2xbf16>
    %24 = arith.truncf %21 : vector<2x512xf32> to vector<2x512xbf16>
    %cst_17 = arith.constant dense<0.000000e+00> : vector<2x512xf32>
    %25 = tpu.matmul %23, %24, %cst_17 {dimension_numbers = #tpu.dot_dimension_numbers<[1], [0], [0], [1], [0, 0, 1, 1], [], []>} : vector<2x2xbf16>, vector<2x512xbf16>, vector<2x512xf32> -> vector<2x512xf32>
    %26 = arith.addf %20, %25 : vector<2x512xf32>
    %27 = vector.broadcast %0 : vector<1x512xf32> to vector<2x512xf32>
    %28 = arith.mulf %26, %27 : vector<2x512xf32>
    %cst_18 = arith.constant 0.000000e+00 : f32
    %29 = vector.broadcast %cst_18 : f32 to vector<2x512xf32>
    %30 = arith.maximumf %28, %29 : vector<2x512xf32>
    %31 = vector.extract_strided_slice %4 {offsets = [1, 0, 0], sizes = [1, 2, 2], strides = [1, 1, 1]} : vector<3x2x2xbf16> to vector<1x2x2xbf16>
    %32 = vector.shape_cast %31 : vector<1x2x2xbf16> to vector<2x2xbf16>
    %33 = arith.truncf %30 : vector<2x512xf32> to vector<2x512xbf16>
    %cst_19 = arith.constant dense<0.000000e+00> : vector<2x512xf32>
    %34 = tpu.matmul %32, %33, %cst_19 {dimension_numbers = #tpu.dot_dimension_numbers<[1], [0], [0], [1], [0, 0, 1, 1], [], []>} : vector<2x2xbf16>, vector<2x512xbf16>, vector<2x512xf32> -> vector<2x512xf32>
    %c1_i32 = arith.constant 1 : i32
    %35 = tpu.dynamic_rotate %30 by %c1_i32 dim 1 : vector<2x512xf32>, i32 -> vector<2x512xf32>
    %36 = vector.extract_strided_slice %4 {offsets = [0, 0, 0], sizes = [1, 2, 2], strides = [1, 1, 1]} : vector<3x2x2xbf16> to vector<1x2x2xbf16>
    %37 = vector.shape_cast %36 : vector<1x2x2xbf16> to vector<2x2xbf16>
    %38 = arith.truncf %35 : vector<2x512xf32> to vector<2x512xbf16>
    %cst_20 = arith.constant dense<0.000000e+00> : vector<2x512xf32>
    %39 = tpu.matmul %37, %38, %cst_20 {dimension_numbers = #tpu.dot_dimension_numbers<[1], [0], [0], [1], [0, 0, 1, 1], [], []>} : vector<2x2xbf16>, vector<2x512xbf16>, vector<2x512xf32> -> vector<2x512xf32>
    %40 = arith.addf %34, %39 : vector<2x512xf32>
    %c511_i32 = arith.constant 511 : i32
    %41 = tpu.dynamic_rotate %30 by %c511_i32 dim 1 : vector<2x512xf32>, i32 -> vector<2x512xf32>
    %42 = vector.extract_strided_slice %4 {offsets = [2, 0, 0], sizes = [1, 2, 2], strides = [1, 1, 1]} : vector<3x2x2xbf16> to vector<1x2x2xbf16>
    %43 = vector.shape_cast %42 : vector<1x2x2xbf16> to vector<2x2xbf16>
    %44 = arith.truncf %41 : vector<2x512xf32> to vector<2x512xbf16>
    %cst_21 = arith.constant dense<0.000000e+00> : vector<2x512xf32>
    %45 = tpu.matmul %43, %44, %cst_21 {dimension_numbers = #tpu.dot_dimension_numbers<[1], [0], [0], [1], [0, 0, 1, 1], [], []>} : vector<2x2xbf16>, vector<2x512xbf16>, vector<2x512xf32> -> vector<2x512xf32>
    %46 = arith.addf %40, %45 : vector<2x512xf32>
    %47 = vector.broadcast %0 : vector<1x512xf32> to vector<2x512xf32>
    %48 = arith.mulf %46, %47 : vector<2x512xf32>
    %c0_22 = arith.constant 0 : index
    %c0_23 = arith.constant 0 : index
    %c0_24 = arith.constant 0 : index
    %49 = vector.load %arg2[%c0_22, %c0_23, %c0_24] : memref<1x2x512xf32, #tpu.memory_space<vmem>>, vector<1x2x512xf32>
    %50 = vector.shape_cast %49 : vector<1x2x512xf32> to vector<2x512xf32>
    %51 = vector.extract_strided_slice %6 {offsets = [1, 0, 0], sizes = [1, 2, 2], strides = [1, 1, 1]} : vector<3x2x2xbf16> to vector<1x2x2xbf16>
    %52 = vector.shape_cast %51 : vector<1x2x2xbf16> to vector<2x2xbf16>
    %53 = arith.truncf %50 : vector<2x512xf32> to vector<2x512xbf16>
    %cst_25 = arith.constant dense<0.000000e+00> : vector<2x512xf32>
    %54 = tpu.matmul %52, %53, %cst_25 {dimension_numbers = #tpu.dot_dimension_numbers<[1], [0], [0], [1], [0, 0, 1, 1], [], []>} : vector<2x2xbf16>, vector<2x512xbf16>, vector<2x512xf32> -> vector<2x512xf32>
    %c1_i32_26 = arith.constant 1 : i32
    %55 = tpu.dynamic_rotate %50 by %c1_i32_26 dim 1 : vector<2x512xf32>, i32 -> vector<2x512xf32>
    %56 = vector.extract_strided_slice %6 {offsets = [0, 0, 0], sizes = [1, 2, 2], strides = [1, 1, 1]} : vector<3x2x2xbf16> to vector<1x2x2xbf16>
    %57 = vector.shape_cast %56 : vector<1x2x2xbf16> to vector<2x2xbf16>
    %58 = arith.truncf %55 : vector<2x512xf32> to vector<2x512xbf16>
    %cst_27 = arith.constant dense<0.000000e+00> : vector<2x512xf32>
    %59 = tpu.matmul %57, %58, %cst_27 {dimension_numbers = #tpu.dot_dimension_numbers<[1], [0], [0], [1], [0, 0, 1, 1], [], []>} : vector<2x2xbf16>, vector<2x512xbf16>, vector<2x512xf32> -> vector<2x512xf32>
    %60 = arith.addf %54, %59 : vector<2x512xf32>
    %c511_i32_28 = arith.constant 511 : i32
    %61 = tpu.dynamic_rotate %50 by %c511_i32_28 dim 1 : vector<2x512xf32>, i32 -> vector<2x512xf32>
    %62 = vector.extract_strided_slice %6 {offsets = [2, 0, 0], sizes = [1, 2, 2], strides = [1, 1, 1]} : vector<3x2x2xbf16> to vector<1x2x2xbf16>
    %63 = vector.shape_cast %62 : vector<1x2x2xbf16> to vector<2x2xbf16>
    %64 = arith.truncf %61 : vector<2x512xf32> to vector<2x512xbf16>
    %cst_29 = arith.constant dense<0.000000e+00> : vector<2x512xf32>
    %65 = tpu.matmul %63, %64, %cst_29 {dimension_numbers = #tpu.dot_dimension_numbers<[1], [0], [0], [1], [0, 0, 1, 1], [], []>} : vector<2x2xbf16>, vector<2x512xbf16>, vector<2x512xf32> -> vector<2x512xf32>
    %66 = arith.addf %60, %65 : vector<2x512xf32>
    %67 = vector.broadcast %0 : vector<1x512xf32> to vector<2x512xf32>
    %68 = arith.mulf %66, %67 : vector<2x512xf32>
    %cst_30 = arith.constant 0.000000e+00 : f32
    %69 = vector.broadcast %cst_30 : f32 to vector<2x512xf32>
    %70 = arith.maximumf %68, %69 : vector<2x512xf32>
    %71 = vector.extract_strided_slice %8 {offsets = [1, 0, 0], sizes = [1, 2, 2], strides = [1, 1, 1]} : vector<3x2x2xbf16> to vector<1x2x2xbf16>
    %72 = vector.shape_cast %71 : vector<1x2x2xbf16> to vector<2x2xbf16>
    %73 = arith.truncf %70 : vector<2x512xf32> to vector<2x512xbf16>
    %cst_31 = arith.constant dense<0.000000e+00> : vector<2x512xf32>
    %74 = tpu.matmul %72, %73, %cst_31 {dimension_numbers = #tpu.dot_dimension_numbers<[1], [0], [0], [1], [0, 0, 1, 1], [], []>} : vector<2x2xbf16>, vector<2x512xbf16>, vector<2x512xf32> -> vector<2x512xf32>
    %c20_i32_32 = arith.constant 20 : i32
    %75 = tpu.dynamic_rotate %70 by %c20_i32_32 dim 1 : vector<2x512xf32>, i32 -> vector<2x512xf32>
    %76 = vector.extract_strided_slice %8 {offsets = [0, 0, 0], sizes = [1, 2, 2], strides = [1, 1, 1]} : vector<3x2x2xbf16> to vector<1x2x2xbf16>
    %77 = vector.shape_cast %76 : vector<1x2x2xbf16> to vector<2x2xbf16>
    %78 = arith.truncf %75 : vector<2x512xf32> to vector<2x512xbf16>
    %cst_33 = arith.constant dense<0.000000e+00> : vector<2x512xf32>
    %79 = tpu.matmul %77, %78, %cst_33 {dimension_numbers = #tpu.dot_dimension_numbers<[1], [0], [0], [1], [0, 0, 1, 1], [], []>} : vector<2x2xbf16>, vector<2x512xbf16>, vector<2x512xf32> -> vector<2x512xf32>
    %80 = arith.addf %74, %79 : vector<2x512xf32>
    %c492_i32_34 = arith.constant 492 : i32
    %81 = tpu.dynamic_rotate %70 by %c492_i32_34 dim 1 : vector<2x512xf32>, i32 -> vector<2x512xf32>
    %82 = vector.extract_strided_slice %8 {offsets = [2, 0, 0], sizes = [1, 2, 2], strides = [1, 1, 1]} : vector<3x2x2xbf16> to vector<1x2x2xbf16>
    %83 = vector.shape_cast %82 : vector<1x2x2xbf16> to vector<2x2xbf16>
    %84 = arith.truncf %81 : vector<2x512xf32> to vector<2x512xbf16>
    %cst_35 = arith.constant dense<0.000000e+00> : vector<2x512xf32>
    %85 = tpu.matmul %83, %84, %cst_35 {dimension_numbers = #tpu.dot_dimension_numbers<[1], [0], [0], [1], [0, 0, 1, 1], [], []>} : vector<2x2xbf16>, vector<2x512xbf16>, vector<2x512xf32> -> vector<2x512xf32>
    %86 = arith.addf %80, %85 : vector<2x512xf32>
    %87 = vector.broadcast %0 : vector<1x512xf32> to vector<2x512xf32>
    %88 = arith.mulf %86, %87 : vector<2x512xf32>
    %c0_36 = arith.constant 0 : index
    %c0_37 = arith.constant 0 : index
    %c0_38 = arith.constant 0 : index
    %89 = vector.load %arg8[%c0_36, %c0_37, %c0_38] : memref<1x2x512xf32, #tpu.memory_space<vmem>>, vector<1x2x512xf32>
    %90 = vector.shape_cast %89 : vector<1x2x512xf32> to vector<2x512xf32>
    %91 = vector.shape_cast %48 : vector<2x512xf32> to vector<1x2x512xf32>
    tpu.vector_store %arg8[%c0_36, %c0_37, %c0_38], %91 {strides = array<i32>} : memref<1x2x512xf32, #tpu.memory_space<vmem>>, vector<1x2x512xf32>,
    %c0_39 = arith.constant 0 : index
    %c0_40 = arith.constant 0 : index
    %c0_41 = arith.constant 0 : index
    %92 = vector.load %arg9[%c0_39, %c0_40, %c0_41] : memref<1x2x512xf32, #tpu.memory_space<vmem>>, vector<1x2x512xf32>
    %93 = vector.shape_cast %92 : vector<1x2x512xf32> to vector<2x512xf32>
    %94 = vector.shape_cast %88 : vector<2x512xf32> to vector<1x2x512xf32>
    tpu.vector_store %arg9[%c0_39, %c0_40, %c0_41], %94 {strides = array<i32>} : memref<1x2x512xf32, #tpu.memory_space<vmem>>, vector<1x2x512xf32>,
    %cst_42 = arith.constant dense<0.000000e+00> : vector<2xf32>
    %95 = vector.multi_reduction <add>, %48, %cst_42 [1] : vector<2x512xf32> to vector<2xf32>
    %96 = vector.shape_cast %95 : vector<2xf32> to vector<2x1xf32>
    %c0_43 = arith.constant 0 : index
    %c0_44 = arith.constant 0 : index
    %c0_45 = arith.constant 0 : index
    %97 = vector.load %arg10[%c0_43, %c0_44, %c0_45] : memref<1x2x4xf32, #tpu.memory_space<vmem>>, vector<1x2x1xf32>
    %98 = vector.shape_cast %97 : vector<1x2x1xf32> to vector<2x1xf32>
    %99 = vector.shape_cast %96 : vector<2x1xf32> to vector<1x2x1xf32>
    tpu.vector_store %arg10[%c0_43, %c0_44, %c0_45], %99 {strides = array<i32>} : memref<1x2x4xf32, #tpu.memory_space<vmem>>, vector<1x2x1xf32>,
    %100 = arith.mulf %48, %48 : vector<2x512xf32>
    %cst_46 = arith.constant dense<0.000000e+00> : vector<2xf32>
    %101 = vector.multi_reduction <add>, %100, %cst_46 [1] : vector<2x512xf32> to vector<2xf32>
    %102 = vector.shape_cast %101 : vector<2xf32> to vector<2x1xf32>
    %c0_47 = arith.constant 0 : index
    %c0_48 = arith.constant 0 : index
    %c1 = arith.constant 1 : index
    %103 = vector.load %arg10[%c0_47, %c0_48, %c1] : memref<1x2x4xf32, #tpu.memory_space<vmem>>, vector<1x2x1xf32>
    %104 = vector.shape_cast %103 : vector<1x2x1xf32> to vector<2x1xf32>
    %105 = vector.shape_cast %102 : vector<2x1xf32> to vector<1x2x1xf32>
    tpu.vector_store %arg10[%c0_47, %c0_48, %c1], %105 {strides = array<i32>} : memref<1x2x4xf32, #tpu.memory_space<vmem>>, vector<1x2x1xf32>,
    %cst_49 = arith.constant dense<0.000000e+00> : vector<2xf32>
    %106 = vector.multi_reduction <add>, %88, %cst_49 [1] : vector<2x512xf32> to vector<2xf32>
    %107 = vector.shape_cast %106 : vector<2xf32> to vector<2x1xf32>
    %c0_50 = arith.constant 0 : index
    %c0_51 = arith.constant 0 : index
    %c2 = arith.constant 2 : index
    %108 = vector.load %arg10[%c0_50, %c0_51, %c2] : memref<1x2x4xf32, #tpu.memory_space<vmem>>, vector<1x2x1xf32>
    %109 = vector.shape_cast %108 : vector<1x2x1xf32> to vector<2x1xf32>
    %110 = vector.shape_cast %107 : vector<2x1xf32> to vector<1x2x1xf32>
    tpu.vector_store %arg10[%c0_50, %c0_51, %c2], %110 {strides = array<i32>} : memref<1x2x4xf32, #tpu.memory_space<vmem>>, vector<1x2x1xf32>,
    %111 = arith.mulf %88, %88 : vector<2x512xf32>
    %cst_52 = arith.constant dense<0.000000e+00> : vector<2xf32>
    %112 = vector.multi_reduction <add>, %111, %cst_52 [1] : vector<2x512xf32> to vector<2xf32>
    %113 = vector.shape_cast %112 : vector<2xf32> to vector<2x1xf32>
    %c0_53 = arith.constant 0 : index
    %c0_54 = arith.constant 0 : index
    %c3 = arith.constant 3 : index
    %114 = vector.load %arg10[%c0_53, %c0_54, %c3] : memref<1x2x4xf32, #tpu.memory_space<vmem>>, vector<1x2x1xf32>
    %115 = vector.shape_cast %114 : vector<1x2x1xf32> to vector<2x1xf32>
    %116 = vector.shape_cast %113 : vector<2x1xf32> to vector<1x2x1xf32>
    tpu.vector_store %arg10[%c0_53, %c0_54, %c3], %116 {strides = array<i32>} : memref<1x2x4xf32, #tpu.memory_space<vmem>>, vector<1x2x1xf32>,
    return
  }
  func.func @transform_0(%arg0: i32) -> (i32, i32, i32) {
    %c0_i32 = arith.constant 0 : i32
    %c0_i32_0 = arith.constant 0 : i32
    %c0_i32_1 = arith.constant 0 : i32
    return %arg0, %c0_i32, %c0_i32_0 : i32, i32, i32
  }
  func.func @transform_1(%arg0: i32) -> (i32, i32, i32) {
    %c0_i32 = arith.constant 0 : i32
    %c0_i32_0 = arith.constant 0 : i32
    %c0_i32_1 = arith.constant 0 : i32
    return %arg0, %c0_i32, %c0_i32_0 : i32, i32, i32
  }
  func.func @transform_2(%arg0: i32) -> (i32, i32) {
    %c0_i32 = arith.constant 0 : i32
    %c0_i32_0 = arith.constant 0 : i32
    %c0_i32_1 = arith.constant 0 : i32
    return %c0_i32, %c0_i32_0 : i32, i32
  }
  func.func @transform_3(%arg0: i32) -> (i32, i32, i32) {
    %c0_i32 = arith.constant 0 : i32
    %c0_i32_0 = arith.constant 0 : i32
    %c0_i32_1 = arith.constant 0 : i32
    %c0_i32_2 = arith.constant 0 : i32
    return %c0_i32, %c0_i32_0, %c0_i32_1 : i32, i32, i32
  }
  func.func @transform_4(%arg0: i32) -> (i32, i32, i32) {
    %c0_i32 = arith.constant 0 : i32
    %c0_i32_0 = arith.constant 0 : i32
    %c0_i32_1 = arith.constant 0 : i32
    %c0_i32_2 = arith.constant 0 : i32
    return %c0_i32, %c0_i32_0, %c0_i32_1 : i32, i32, i32
  }
  func.func @transform_5(%arg0: i32) -> (i32, i32, i32) {
    %c0_i32 = arith.constant 0 : i32
    %c0_i32_0 = arith.constant 0 : i32
    %c0_i32_1 = arith.constant 0 : i32
    %c0_i32_2 = arith.constant 0 : i32
    return %c0_i32, %c0_i32_0, %c0_i32_1 : i32, i32, i32
  }
  func.func @transform_6(%arg0: i32) -> (i32, i32, i32) {
    %c0_i32 = arith.constant 0 : i32
    %c0_i32_0 = arith.constant 0 : i32
    %c0_i32_1 = arith.constant 0 : i32
    %c0_i32_2 = arith.constant 0 : i32
    return %c0_i32, %c0_i32_0, %c0_i32_1 : i32, i32, i32
  }
  func.func @transform_7(%arg0: i32) -> (i32, i32, i32) {
    %c0_i32 = arith.constant 0 : i32
    %c0_i32_0 = arith.constant 0 : i32
    %c0_i32_1 = arith.constant 0 : i32
    return %arg0, %c0_i32, %c0_i32_0 : i32, i32, i32
  }
  func.func @transform_8(%arg0: i32) -> (i32, i32, i32) {
    %c0_i32 = arith.constant 0 : i32
    %c0_i32_0 = arith.constant 0 : i32
    %c0_i32_1 = arith.constant 0 : i32
    return %arg0, %c0_i32, %c0_i32_0 : i32, i32, i32
  }
  func.func @transform_9(%arg0: i32) -> (i32, i32, i32) {
    %c0_i32 = arith.constant 0 : i32
    %c0_i32_0 = arith.constant 0 : i32
    %c0_i32_1 = arith.constant 0 : i32
    return %arg0, %c0_i32, %c0_i32_0 : i32, i32, i32
  }
}

</mosaic_0001>

<llo_original>
// kernel: tpu_custom_call.1
$region0: #{tpu_custom_call.1}
  #allocation0 [shape = 'u32[]', space=smem, size = 0x4, offset = 0x4, fixed_abs, tag = 'smem constant byte address 0x4 - core index']
  #allocation1 [shape = 'u32[144,128]{1,0:T(1,128)}', space=vmem, size = 0x12000, scoped, tag = 'internal scratch']
  %s0 = inlined_call_operand.vmem [shape: f32[2,2,512], index: 0, kind: input, shape index: {}]
  %s1 = inlined_call_operand.vmem [shape: f32[2,2,512], index: 1, kind: input, shape index: {}]
  %s2 = inlined_call_operand.hbm [shape: f32[1,512], index: 2, kind: input, shape index: {}]
  %s3 = inlined_call_operand.vmem [shape: f32[3,2,2], index: 3, kind: input, shape index: {}]
  %s4 = inlined_call_operand.vmem [shape: f32[3,2,2], index: 4, kind: input, shape index: {}]
  %s5 = inlined_call_operand.vmem [shape: f32[3,2,2], index: 5, kind: input, shape index: {}]
  %s6 = inlined_call_operand.vmem [shape: f32[3,2,2], index: 6, kind: input, shape index: {}]
  %s7 = inlined_call_operand.hbm [shape: f32[2,2,512], index: 7, kind: output, shape index: {0}]
  %s8 = inlined_call_operand.hbm [shape: f32[2,2,512], index: 8, kind: output, shape index: {1}]
  %s9 = inlined_call_operand.hbm [shape: f32[2,2,4], index: 9, kind: output, shape index: {2}]
  %10 = xla_tuple %s7, %s8, %s9
  %s11 = sld [smem:[#allocation0]]
  $region81: #{tpu_custom_call.1} parent=0
    _
  %s13 = ssub.s32 1, %s11
  %s14 = scalar_select 0, %s13, %s11
  $region1: #{tpu_custom_call.1} parent=0
    #allocation2 [shape = 'u8[2048]{0}', space=vmem, size = 0x800, scoped, tag = 'input window, operand 2, single buffered']
    #allocation3 [shape = 's32[2]{0}', space=sflag, size = 0x8, scoped, tag = 'scoped memory for tpu_custom_call.1']
    #allocation4 [shape = 's32[2]{0}', space=sflag, size = 0x8, scoped, tag = 'scoped memory for tpu_custom_call.1']
    #allocation5 [shape = 'u8[8192]{0}', space=vmem, size = 0x2000, scoped, tag = 'output window, operand 0']
    #allocation6 [shape = 'u8[8192]{0}', space=vmem, size = 0x2000, scoped, tag = 'output window, operand 1']
    #allocation7 [shape = 's32[2]{0}', space=sflag, size = 0x8, scoped, tag = 'scoped memory for tpu_custom_call.1']
    #allocation8 [shape = 'u8[2048]{0}', space=vmem, size = 0x800, scoped, tag = 'output window, operand 2']
    %15 = vsyncpa [#allocation3], 0
    %16 = vsyncpa [#allocation4], 0
    %s17 = scalar_lea.sflag [#allocation4], 1
    %18 = vsyncpa %s17, 0
    %19 = vsyncpa [#allocation7], 0
    %s20 = scalar_lea.sflag [#allocation7], 1
    %21 = vsyncpa %s20, 0
    loop: start=0, step=1, limit=4
    $region2: #{tpu_custom_call.1} parent=1 // loop_pre_header
      _
    $region3: #{tpu_custom_call.1} parent=1 // loop_header
      %s23 = sphi 0, %s27
      %p24 = scmp.ge.s32.totalorder %s23, 4
      %s33 = sphi 0, %s35
      %s36 = sphi 0, %s33
      %s37 = sphi 0, %s36
      %s53 = sphi 0, %s37
      %s59 = sphi 0, %s61
      %s62 = sphi 0, %s59
      %s63 = sphi 0, %s62
      %s79 = sphi 0, %s63
      %s83 = sphi 0, %s83
      %s85 = sphi 0, %s83
      %s86 = sphi 0, %s85
      %s100 = sphi 0, %s86
      %s104 = sphi 0, %s104
      %s106 = sphi 0, %s104
      %s107 = sphi 0, %s106
      %s121 = sphi 0, %s107
      %s125 = sphi 0, %s125
      %s127 = sphi 0, %s125
      %s128 = sphi 0, %s127
      %s142 = sphi 0, %s128
      %s146 = sphi 0, %s146
      %s148 = sphi 0, %s146
      %s149 = sphi 0, %s148
      %s163 = sphi 0, %s149
      %s167 = sphi 0, %s167
      %s169 = sphi 0, %s167
      %s170 = sphi 0, %s169
      %s184 = sphi 0, %s170
      %s190 = sphi 0, %s192
      %s193 = sphi 0, %s190
      %s194 = sphi 0, %s193
      %s210 = sphi 0, %s194
      %s216 = sphi 0, %s218
      %s219 = sphi 0, %s216
      %s220 = sphi 0, %s219
      %s236 = sphi 0, %s220
      %s242 = sphi 0, %s244
      %s245 = sphi 0, %s242
      %s246 = sphi 0, %s245
      %s262 = sphi 0, %s246
    $region4: #{tpu_custom_call.1} parent=1 // loop_header_branch
      %26 = sbr.rel (%p24) target = $region8
    $region5: #{tpu_custom_call.1} parent=1 // loop_body
      %s28 = ssub.s32 %s23, 1
      %s29 = ssub.s32 %s23, 2
      %s30 = sadd.s32 %s23, 1
      %s31 = ssub.s32 %s23, %s30
      %p32 = scmp.eq.s32.totalorder %s31, 0
      %s34 = sadd.s32 %s33, 1
      %s35 = scalar_select %p32, %s33, %s34
      %p38 = pneg %p32
      %p39 = scmp.eq.s32.totalorder %s23, 1
      %p40 = por %p38, %p39
      %p41 = scmp.ne.s32.totalorder %s33, %s36
      %p42 = scmp.eq.s32.totalorder %s23, 0
      %p43 = por %p41, %p42
      %p44 = scmp.ne.s32.totalorder %s33, %s36
      %p45 = scmp.eq.s32.totalorder %s28, 1
      %p46 = por %p44, %p45
      %p47 = scmp.ne.s32.totalorder %s36, %s37
      %p48 = scmp.eq.s32.totalorder %s28, 0
      %p49 = por %p47, %p48
      %p50 = scmp.ne.s32.totalorder %s36, %s37
      %p51 = scmp.eq.s32.totalorder %s29, 1
      %p52 = por %p50, %p51
      %p54 = scmp.ne.s32.totalorder %s37, %s53
      %p55 = scmp.eq.s32.totalorder %s29, 0
      %p56 = por %p54, %p55
      %s57 = ssub.s32 %s23, %s30
      %p58 = scmp.eq.s32.totalorder %s57, 0
      %s60 = sadd.s32 %s59, 1
      %s61 = scalar_select %p58, %s59, %s60
      %p64 = pneg %p58
      %p65 = scmp.eq.s32.totalorder %s23, 1
      %p66 = por %p64, %p65
      %p67 = scmp.ne.s32.totalorder %s59, %s62
      %p68 = scmp.eq.s32.totalorder %s23, 0
      %p69 = por %p67, %p68
      %p70 = scmp.ne.s32.totalorder %s59, %s62
      %p71 = scmp.eq.s32.totalorder %s28, 1
      %p72 = por %p70, %p71
      %p73 = scmp.ne.s32.totalorder %s62, %s63
      %p74 = scmp.eq.s32.totalorder %s28, 0
      %p75 = por %p73, %p74
      %p76 = scmp.ne.s32.totalorder %s62, %s63
      %p77 = scmp.eq.s32.totalorder %s29, 1
      %p78 = por %p76, %p77
      %p80 = scmp.ne.s32.totalorder %s63, %s79
      %p81 = scmp.eq.s32.totalorder %s29, 0
      %p82 = por %p80, %p81
      %s84 = sadd.s32 %s83, 1
      %p87 = scmp.eq.s32.totalorder %s23, 1
      %p88 = scmp.ne.s32.totalorder %s83, %s85
      %p89 = scmp.eq.s32.totalorder %s23, 0
      %p90 = por %p88, %p89
      %p91 = scmp.ne.s32.totalorder %s83, %s85
      %p92 = scmp.eq.s32.totalorder %s28, 1
      %p93 = por %p91, %p92
      %p94 = scmp.ne.s32.totalorder %s85, %s86
      %p95 = scmp.eq.s32.totalorder %s28, 0
      %p96 = por %p94, %p95
      %p97 = scmp.ne.s32.totalorder %s85, %s86
      %p98 = scmp.eq.s32.totalorder %s29, 1
      %p99 = por %p97, %p98
      %p101 = scmp.ne.s32.totalorder %s86, %s100
      %p102 = scmp.eq.s32.totalorder %s29, 0
      %p103 = por %p101, %p102
      %s105 = sadd.s32 %s104, 1
      %p108 = scmp.eq.s32.totalorder %s23, 1
      %p109 = scmp.ne.s32.totalorder %s104, %s106
      %p110 = scmp.eq.s32.totalorder %s23, 0
      %p111 = por %p109, %p110
      %p112 = scmp.ne.s32.totalorder %s104, %s106
      %p113 = scmp.eq.s32.totalorder %s28, 1
      %p114 = por %p112, %p113
      %p115 = scmp.ne.s32.totalorder %s106, %s107
      %p116 = scmp.eq.s32.totalorder %s28, 0
      %p117 = por %p115, %p116
      %p118 = scmp.ne.s32.totalorder %s106, %s107
      %p119 = scmp.eq.s32.totalorder %s29, 1
      %p120 = por %p118, %p119
      %p122 = scmp.ne.s32.totalorder %s107, %s121
      %p123 = scmp.eq.s32.totalorder %s29, 0
      %p124 = por %p122, %p123
      %s126 = sadd.s32 %s125, 1
      %p129 = scmp.eq.s32.totalorder %s23, 1
      %p130 = scmp.ne.s32.totalorder %s125, %s127
      %p131 = scmp.eq.s32.totalorder %s23, 0
      %p132 = por %p130, %p131
      %p133 = scmp.ne.s32.totalorder %s125, %s127
      %p134 = scmp.eq.s32.totalorder %s28, 1
      %p135 = por %p133, %p134
      %p136 = scmp.ne.s32.totalorder %s127, %s128
      %p137 = scmp.eq.s32.totalorder %s28, 0
      %p138 = por %p136, %p137
      %p139 = scmp.ne.s32.totalorder %s127, %s128
      %p140 = scmp.eq.s32.totalorder %s29, 1
      %p141 = por %p139, %p140
      %p143 = scmp.ne.s32.totalorder %s128, %s142
      %p144 = scmp.eq.s32.totalorder %s29, 0
      %p145 = por %p143, %p144
      %s147 = sadd.s32 %s146, 1
      %p150 = scmp.eq.s32.totalorder %s23, 1
      %p151 = scmp.ne.s32.totalorder %s146, %s148
      %p152 = scmp.eq.s32.totalorder %s23, 0
      %p153 = por %p151, %p152
      %p154 = scmp.ne.s32.totalorder %s146, %s148
      %p155 = scmp.eq.s32.totalorder %s28, 1
      %p156 = por %p154, %p155
      %p157 = scmp.ne.s32.totalorder %s148, %s149
      %p158 = scmp.eq.s32.totalorder %s28, 0
      %p159 = por %p157, %p158
      %p160 = scmp.ne.s32.totalorder %s148, %s149
      %p161 = scmp.eq.s32.totalorder %s29, 1
      %p162 = por %p160, %p161
      %p164 = scmp.ne.s32.totalorder %s149, %s163
      %p165 = scmp.eq.s32.totalorder %s29, 0
      %p166 = por %p164, %p165
      %s168 = sadd.s32 %s167, 1
      %p171 = scmp.eq.s32.totalorder %s23, 1
      %p172 = scmp.ne.s32.totalorder %s167, %s169
      %p173 = scmp.eq.s32.totalorder %s23, 0
      %p174 = por %p172, %p173
      %p175 = scmp.ne.s32.totalorder %s167, %s169
      %p176 = scmp.eq.s32.totalorder %s28, 1
      %p177 = por %p175, %p176
      %p178 = scmp.ne.s32.totalorder %s169, %s170
      %p179 = scmp.eq.s32.totalorder %s28, 0
      %p180 = por %p178, %p179
      %p181 = scmp.ne.s32.totalorder %s169, %s170
      %p182 = scmp.eq.s32.totalorder %s29, 1
      %p183 = por %p181, %p182
      %p185 = scmp.ne.s32.totalorder %s170, %s184
      %p186 = scmp.eq.s32.totalorder %s29, 0
      %p187 = por %p185, %p186
      %s188 = ssub.s32 %s23, %s30
      %p189 = scmp.eq.s32.totalorder %s188, 0
      %s191 = sadd.s32 %s190, 1
      %s192 = scalar_select %p189, %s190, %s191
      %p195 = pneg %p189
      %p196 = scmp.eq.s32.totalorder %s23, 1
      %p197 = por %p195, %p196
      %p198 = scmp.ne.s32.totalorder %s190, %s193
      %p199 = scmp.eq.s32.totalorder %s23, 0
      %p200 = por %p198, %p199
      %p201 = scmp.ne.s32.totalorder %s190, %s193
      %p202 = scmp.eq.s32.totalorder %s28, 1
      %p203 = por %p201, %p202
      %p204 = scmp.ne.s32.totalorder %s193, %s194
      %p205 = scmp.eq.s32.totalorder %s28, 0
      %p206 = por %p204, %p205
      %p207 = scmp.ne.s32.totalorder %s193, %s194
      %p208 = scmp.eq.s32.totalorder %s29, 1
      %p209 = por %p207, %p208
      %p211 = scmp.ne.s32.totalorder %s194, %s210
      %p212 = scmp.eq.s32.totalorder %s29, 0
      %p213 = por %p211, %p212
      %s214 = ssub.s32 %s23, %s30
      %p215 = scmp.eq.s32.totalorder %s214, 0
      %s217 = sadd.s32 %s216, 1
      %s218 = scalar_select %p215, %s216, %s217
      %p221 = pneg %p215
      %p222 = scmp.eq.s32.totalorder %s23, 1
      %p223 = por %p221, %p222
      %p224 = scmp.ne.s32.totalorder %s216, %s219
      %p225 = scmp.eq.s32.totalorder %s23, 0
      %p226 = por %p224, %p225
      %p227 = scmp.ne.s32.totalorder %s216, %s219
      %p228 = scmp.eq.s32.totalorder %s28, 1
      %p229 = por %p227, %p228
      %p230 = scmp.ne.s32.totalorder %s219, %s220
      %p231 = scmp.eq.s32.totalorder %s28, 0
      %p232 = por %p230, %p231
      %p233 = scmp.ne.s32.totalorder %s219, %s220
      %p234 = scmp.eq.s32.totalorder %s29, 1
      %p235 = por %p233, %p234
      %p237 = scmp.ne.s32.totalorder %s220, %s236
      %p238 = scmp.eq.s32.totalorder %s29, 0
      %p239 = por %p237, %p238
      %s240 = ssub.s32 %s23, %s30
      %p241 = scmp.eq.s32.totalorder %s240, 0
      %s243 = sadd.s32 %s242, 1
      %s244 = scalar_select %p241, %s242, %s243
      %p247 = pneg %p241
      %p248 = scmp.eq.s32.totalorder %s23, 1
      %p249 = por %p247, %p248
      %p250 = scmp.ne.s32.totalorder %s242, %s245
      %p251 = scmp.eq.s32.totalorder %s23, 0
      %p252 = por %p250, %p251
      %p253 = scmp.ne.s32.totalorder %s242, %s245
      %p254 = scmp.eq.s32.totalorder %s28, 1
      %p255 = por %p253, %p254
      %p256 = scmp.ne.s32.totalorder %s245, %s246
      %p257 = scmp.eq.s32.totalorder %s28, 0
      %p258 = por %p256, %p257
      %p259 = scmp.ne.s32.totalorder %s245, %s246
      %p260 = scmp.eq.s32.totalorder %s29, 1
      %p261 = por %p259, %p260
      %p263 = scmp.ne.s32.totalorder %s246, %s262
      %p264 = scmp.eq.s32.totalorder %s29, 0
      %p265 = por %p263, %p264
      %p266 = scmp.le.s32.totalorder 1, %s23
      %p267 = scmp.lt.s32.totalorder %s23, 3
      %p268 = pnand %p266, %p267
      %p269 = pneg %p268
      // Predicated region
      $region9: #{tpu_custom_call.1} parent=5 // pred_check
        _
      $region10: #{tpu_custom_call.1} parent=5 // pred_check_branch
        %271 = sbr.rel (%p268) target = $region12
      $region11: #{tpu_custom_call.1} parent=5 // pred_region
        %s272 = ssub.s32 %s23, 1
        // Predicated region
        $region13: #{tpu_custom_call.1} parent=11 // pred_check
          %p273 = pneg %p96
        $region14: #{tpu_custom_call.1} parent=11 // pred_check_branch
          %275 = sbr.rel (%p273) target = $region16
        $region15: #{tpu_custom_call.1} parent=11 // pred_region
          %s277 = ssub.s32 64, 64
          %278 = vsyncadd [#allocation3], %s277
          %s280 = sshll.u32 [#allocation2], 4
          %s281 = int_to_ptr.vmem [resolvable:$true] %s280
          %283 = dma.hbm_to_vmem [thread:$0]  %s2, 64, %s281, [#allocation3]
        $region16: #{tpu_custom_call.1} parent=11 // pred_fallthru
          _
        // Predicated region
        $region17: #{tpu_custom_call.1} parent=11 // pred_check
          %p284 = pneg %p117
        $region18: #{tpu_custom_call.1} parent=11 // pred_check_branch
          %286 = sbr.rel (%p284) target = $region20
        $region19: #{tpu_custom_call.1} parent=11 // pred_region
          _
        $region20: #{tpu_custom_call.1} parent=11 // pred_fallthru
          _
        // Predicated region
        $region21: #{tpu_custom_call.1} parent=11 // pred_check
          %p287 = pneg %p138
        $region22: #{tpu_custom_call.1} parent=11 // pred_check_branch
          %289 = sbr.rel (%p287) target = $region24
        $region23: #{tpu_custom_call.1} parent=11 // pred_region
          _
        $region24: #{tpu_custom_call.1} parent=11 // pred_fallthru
          _
        // Predicated region
        $region25: #{tpu_custom_call.1} parent=11 // pred_check
          %p290 = pneg %p159
        $region26: #{tpu_custom_call.1} parent=11 // pred_check_branch
          %292 = sbr.rel (%p290) target = $region28
        $region27: #{tpu_custom_call.1} parent=11 // pred_region
          _
        $region28: #{tpu_custom_call.1} parent=11 // pred_fallthru
          _
        // Predicated region
        $region29: #{tpu_custom_call.1} parent=11 // pred_check
          %p293 = pneg %p180
        $region30: #{tpu_custom_call.1} parent=11 // pred_check_branch
          %295 = sbr.rel (%p293) target = $region32
        $region31: #{tpu_custom_call.1} parent=11 // pred_region
          _
        $region32: #{tpu_custom_call.1} parent=11 // pred_fallthru
          _
      $region12: #{tpu_custom_call.1} parent=5 // pred_fallthru
        _
      %p296 = scmp.lt.s32.totalorder %s23, 2
      // Predicated region
      $region33: #{tpu_custom_call.1} parent=5 // pred_check
        %p297 = pneg %p296
      $region34: #{tpu_custom_call.1} parent=5 // pred_check_branch
        %299 = sbr.rel (%p297) target = $region36
      $region35: #{tpu_custom_call.1} parent=5 // pred_region
        // Predicated region
        $region37: #{tpu_custom_call.1} parent=35 // pred_check
          %p300 = pneg %p43
        $region38: #{tpu_custom_call.1} parent=35 // pred_check_branch
          %302 = sbr.rel (%p300) target = $region40
        $region39: #{tpu_custom_call.1} parent=35 // pred_region
          %p303 = scmp.lt.s32.totalorder %s23, 1
          %s304 = scalar_select %p303, %s23, 1
          %s305 = smul.addr %s304, 4
          %s306 = smul.addr %s305, 2
          %s307 = scalar_lea.vmem %s0, %s306
        $region40: #{tpu_custom_call.1} parent=35 // pred_fallthru
          _
        // Predicated region
        $region41: #{tpu_custom_call.1} parent=35 // pred_check
          %p308 = pneg %p69
        $region42: #{tpu_custom_call.1} parent=35 // pred_check_branch
          %310 = sbr.rel (%p308) target = $region44
        $region43: #{tpu_custom_call.1} parent=35 // pred_region
          %p311 = scmp.lt.s32.totalorder %s23, 1
          %s312 = scalar_select %p311, %s23, 1
          %s313 = smul.addr %s312, 4
          %s314 = smul.addr %s313, 2
          %s315 = scalar_lea.vmem %s1, %s314
        $region44: #{tpu_custom_call.1} parent=35 // pred_fallthru
          _
      $region36: #{tpu_custom_call.1} parent=5 // pred_fallthru
        _
      %p316 = scmp.le.s32.totalorder 1, %s23
      %p317 = scmp.lt.s32.totalorder %s23, 3
      %p318 = pnand %p316, %p317
      %p319 = pneg %p318
      // Predicated region
      $region45: #{tpu_custom_call.1} parent=5 // pred_check
        _
      $region46: #{tpu_custom_call.1} parent=5 // pred_check_branch
        %321 = sbr.rel (%p318) target = $region48
      $region47: #{tpu_custom_call.1} parent=5 // pred_region
        %s322 = ssub.s32 %s23, 1
        // Predicated region
        $region49: #{tpu_custom_call.1} parent=47 // pred_check
          %p323 = pneg %p96
        $region50: #{tpu_custom_call.1} parent=47 // pred_check_branch
          %325 = sbr.rel (%p323) target = $region52
        $region51: #{tpu_custom_call.1} parent=47 // pred_region
          %326 = dma.done [#allocation3], 64
        $region52: #{tpu_custom_call.1} parent=47 // pred_fallthru
          _
        %p327 = scmp.lt.s32.totalorder %s28, 1
        %s328 = scalar_select %p327, %s28, 1
        %s329 = smul.addr %s328, 4
        %s330 = smul.addr %s329, 2
        %s331 = scalar_lea.vmem %s0, %s330
        %p332 = pneg %p49
        %p333 = pneg %p46
        %p334 = scmp.lt.s32.totalorder %s28, 1
        %s335 = scalar_select %p334, %s28, 1
        %s336 = smul.addr %s335, 4
        %s337 = smul.addr %s336, 2
        %s338 = scalar_lea.vmem %s1, %s337
        %p339 = pneg %p75
        %p340 = pneg %p72
        %p341 = pneg %p96
        %p342 = pneg %p93
        %p343 = pneg %p117
        %p344 = pneg %p114
        %p345 = pneg %p138
        %p346 = pneg %p135
        %p347 = pneg %p159
        %p348 = pneg %p156
        %p349 = pneg %p180
        %p350 = pneg %p177
        %p351 = pneg %p206
        %p352 = pneg %p203
        %s353 = sand.u32 %s193, 1
        %s354 = scalar_lea.sflag [#allocation4], %s353
        %s355 = sand.u32 %s193, 1
        %s356 = smul.addr %s355, 8
        %s357 = scalar_lea.vmem [#allocation5], %s356
        %p358 = pneg %p232
        %p359 = pneg %p229
        %s360 = sand.u32 %s28, 1
        %s361 = scalar_lea.sflag [#allocation7], %s360
        %s362 = sand.u32 %s219, 1
        %s363 = smul.addr %s362, 8
        %s364 = scalar_lea.vmem [#allocation6], %s363
        %p365 = pneg %p258
        %p366 = pneg %p255
        %s367 = sand.u32 %s28, 1
        %s368 = scalar_lea.sflag [#allocation7], %s367
        %s369 = sand.u32 %s245, 1
        %s370 = smul.addr %s369, 2
        %s371 = scalar_lea.vmem [#allocation8], %s370
        %p372 = scmp.lt.s32.totalorder %s28, 1
        %s373 = scalar_select %p372, %s28, 1
        %s374 = smul.addr %s373, 4
        %s375 = smul.addr %s374, 2
        %s376 = scalar_lea.vmem %s0, %s375
        %p377 = scmp.lt.s32.totalorder %s28, 1
        %s378 = scalar_select %p377, %s28, 1
        %s379 = smul.addr %s378, 4
        %s380 = smul.addr %s379, 2
        %s381 = scalar_lea.vmem %s1, %s380
        %v383 = vld [vmem:[#allocation2] sm:$0xf]
        %v384 = vld [vmem:[%s3] sm:$0x3]
        %v385 = vld [vmem:[%s3 + $0x2] sm:$0x3]
        %v386 = vld [vmem:[%s3 + $0x4] sm:$0x3]
        %v387 = vpack.c.bf16 %v384, %v384
        %v388 = vpack.c.bf16 %v385, %v385
        %v389 = vpack.c.bf16 %v386, %v386
        %v390 = vld [vmem:[%s4] sm:$0x3]
        %v391 = vld [vmem:[%s4 + $0x2] sm:$0x3]
        %v392 = vld [vmem:[%s4 + $0x4] sm:$0x3]
        %v393 = vpack.c.bf16 %v390, %v390
        %v394 = vpack.c.bf16 %v391, %v391
        %v395 = vpack.c.bf16 %v392, %v392
        %v396 = vld [vmem:[%s5] sm:$0x3]
        %v397 = vld [vmem:[%s5 + $0x2] sm:$0x3]
        %v398 = vld [vmem:[%s5 + $0x4] sm:$0x3]
        %v399 = vpack.c.bf16 %v396, %v396
        %v400 = vpack.c.bf16 %v397, %v397
        %v401 = vpack.c.bf16 %v398, %v398
        %v402 = vld [vmem:[%s6] sm:$0x3]
        %v403 = vld [vmem:[%s6 + $0x2] sm:$0x3]
        %v404 = vld [vmem:[%s6 + $0x4] sm:$0x3]
        %v405 = vpack.c.bf16 %v402, %v402
        %v406 = vpack.c.bf16 %v403, %v403
        %v407 = vpack.c.bf16 %v404, %v404
        %v408 = vld [vmem:[%s376] sm:$0xff]
        %v410 = vcombine.high %v408, %v408
        %v412 = vunpack.c.l.s4 1983009808
        %v413 = vunpack.c.0.s8 %v412
        %v414 = vlaneseq
        %v415 = vshrl.u32 %v414, 7
        %v416 = vsub.s32 %v413, %v415
        %v417 = vrot.slane %v408, %v416
        %v419 = vunpack.c.l.s4 1983009808
        %v420 = vunpack.c.0.s8 %v419
        %v421 = vlaneseq
        %v422 = vshrl.u32 %v421, 7
        %v423 = vsub.s32 %v420, %v422
        %v424 = vrot.slane %v410, %v423
        %v425 = vcombine.high %v417, %v417
        %v426 = vcombine.high %v424, %v424
        %v431 = vpack.c.bf16 %v417, %v417
        %v432 = vpack.c.bf16 %v425, %v425
        %v433 = vpack.c.bf16 %v424, %v424
        %v434 = vpack.c.bf16 %v426, %v426
        %435 = vrot.lane.b32.xlu0 %v417, 20
        %v436 = vpop.permute.xlu0 %435
        %437 = vrot.lane.b32.xlu0 %v425, 20
        %v438 = vpop.permute.xlu0 %437
        %439 = vrot.lane.b32.xlu0 %v424, 20
        %v440 = vpop.permute.xlu0 %439
        %441 = vrot.lane.b32.xlu0 %v426, 20
        %v442 = vpop.permute.xlu0 %441
        %v443 = vlaneseq
        %v444 = vand.u32 %v443, 127
        %vm445 = vcmp.lt.s32.totalorder %v444, 20
        %v446 = vsel %vm445, %v440, %v442
        %v447 = vsel %vm445, %v438, %v440
        %v448 = vsel %vm445, %v436, %v438
        %v449 = vsel %vm445, %v442, %v436
        %v450 = vpack.c.bf16 %v449, %v449
        %v451 = vpack.c.bf16 %v448, %v448
        %v452 = vpack.c.bf16 %v447, %v447
        %v453 = vpack.c.bf16 %v446, %v446
        %vm454 = vcmask 15360
        %v456 = vsel %vm454, %v387, 0
        %vm458 = vcmask 1040384
        %v460 = vsel %vm458, %v450, 0
        %v463 = vsel %vm458, %v451, 0
        %v466 = vsel %vm458, %v452, 0
        %v469 = vsel %vm458, %v453, 0
        %471 = vmatprep.subr.bf16.mxu0 %v463
        %472 = vmatpush1.bf16.msra.mxu0 %v460
        %473 = vmatprep.subr.bf16.mxu0 0
        %474 = vmatpush1.bf16.msra.mxu0 0
        %475 = vmatprep.subr.bf16.mxu0 0
        %476 = vmatpush1.bf16.msra.mxu0 0
        %477 = vmatprep.subr.bf16.mxu0 0
        %478 = vmatpush1.bf16.msra.mxu0 0
        %479 = vmatprep.subr.bf16.mxu0 0
        %480 = vmatpush1.bf16.msra.mxu0 0
        %481 = vmatprep.subr.bf16.mxu0 0
        %482 = vmatpush1.bf16.msra.mxu0 0
        %483 = vmatprep.subr.bf16.mxu0 0
        %484 = vmatpush1.bf16.msra.mxu0 0
        %485 = vmatprep.subr.bf16.mxu0 0
        %486 = vmatpush1.bf16.msra.mxu0 0
        %487 = vmatprep.subr.bf16.mxu0 0
        %488 = vmatpush1.bf16.msra.mxu0 0
        %489 = vmatprep.subr.bf16.mxu0 0
        %490 = vmatpush1.bf16.msra.mxu0 0
        %491 = vmatprep.subr.bf16.mxu0 0
        %492 = vmatpush1.bf16.msra.mxu0 0
        %493 = vmatprep.subr.bf16.mxu0 0
        %494 = vmatpush1.bf16.msra.mxu0 0
        %495 = vmatprep.subr.bf16.mxu0 0
        %496 = vmatpush1.bf16.msra.mxu0 0
        %497 = vmatprep.subr.bf16.mxu0 0
        %498 = vmatpush1.bf16.msra.mxu0 0
        %499 = vmatprep.subr.bf16.mxu0 0
        %500 = vmatpush1.bf16.msra.mxu0 0
        %501 = vmatprep.subr.bf16.mxu0 0
        %502 = vmatpush1.bf16.msra.mxu0 0
        %503 = vmatprep.mubr.bf16.mxu0 0
        %504 = vmatmul.mubr.bf16.gmra.mrb[0].mxu0 %v456
        %v505 = vpop.f32.mrb[0].mxu0
        %v506 = vadd.f32 0.0, %v505
        %v507 = vpop.f32.mrb[0].mxu0
        %v508 = vadd.f32 0.0, %v507
        %v509 = vpop.f32.mrb[0].mxu0
        %v510 = vpop.f32.mrb[0].mxu0
        %511 = vdwg.mxu0
        %512 = vmatprep.subr.bf16.mxu0 %v469
        %513 = vmatpush1.bf16.msra.mxu0 %v466
        %514 = vmatprep.subr.bf16.mxu0 0
        %515 = vmatpush1.bf16.msra.mxu0 0
        %516 = vmatprep.subr.bf16.mxu0 0
        %517 = vmatpush1.bf16.msra.mxu0 0
        %518 = vmatprep.subr.bf16.mxu0 0
        %519 = vmatpush1.bf16.msra.mxu0 0
        %520 = vmatprep.subr.bf16.mxu0 0
        %521 = vmatpush1.bf16.msra.mxu0 0
        %522 = vmatprep.subr.bf16.mxu0 0
        %523 = vmatpush1.bf16.msra.mxu0 0
        %524 = vmatprep.subr.bf16.mxu0 0
        %525 = vmatpush1.bf16.msra.mxu0 0
        %526 = vmatprep.subr.bf16.mxu0 0
        %527 = vmatpush1.bf16.msra.mxu0 0
        %528 = vmatprep.subr.bf16.mxu0 0
        %529 = vmatpush1.bf16.msra.mxu0 0
        %530 = vmatprep.subr.bf16.mxu0 0
        %531 = vmatpush1.bf16.msra.mxu0 0
        %532 = vmatprep.subr.bf16.mxu0 0
        %533 = vmatpush1.bf16.msra.mxu0 0
        %534 = vmatprep.subr.bf16.mxu0 0
        %535 = vmatpush1.bf16.msra.mxu0 0
        %536 = vmatprep.subr.bf16.mxu0 0
        %537 = vmatpush1.bf16.msra.mxu0 0
        %538 = vmatprep.subr.bf16.mxu0 0
        %539 = vmatpush1.bf16.msra.mxu0 0
        %540 = vmatprep.subr.bf16.mxu0 0
        %541 = vmatpush1.bf16.msra.mxu0 0
        %542 = vmatprep.subr.bf16.mxu0 0
        %543 = vmatpush1.bf16.msra.mxu0 0
        %544 = vmatprep.mubr.bf16.mxu0 0
        %545 = vmatmul.mubr.bf16.gmra.mrb[0].mxu0 %v456
        %v546 = vpop.f32.mrb[0].mxu0
        %v547 = vadd.f32 0.0, %v546
        %v548 = vpop.f32.mrb[0].mxu0
        %v549 = vadd.f32 0.0, %v548
        %v550 = vpop.f32.mrb[0].mxu0
        %v551 = vpop.f32.mrb[0].mxu0
        %552 = vdwg.mxu0
        %v554 = vsel %vm454, %v388, 0
        %v557 = vsel %vm458, %v431, 0
        %v560 = vsel %vm458, %v432, 0
        %v563 = vsel %vm458, %v433, 0
        %v566 = vsel %vm458, %v434, 0
        %568 = vmatprep.subr.bf16.mxu0 %v560
        %569 = vmatpush1.bf16.msra.mxu0 %v557
        %570 = vmatprep.subr.bf16.mxu0 0
        %571 = vmatpush1.bf16.msra.mxu0 0
        %572 = vmatprep.subr.bf16.mxu0 0
        %573 = vmatpush1.bf16.msra.mxu0 0
        %574 = vmatprep.subr.bf16.mxu0 0
        %575 = vmatpush1.bf16.msra.mxu0 0
        %576 = vmatprep.subr.bf16.mxu0 0
        %577 = vmatpush1.bf16.msra.mxu0 0
        %578 = vmatprep.subr.bf16.mxu0 0
        %579 = vmatpush1.bf16.msra.mxu0 0
        %580 = vmatprep.subr.bf16.mxu0 0
        %581 = vmatpush1.bf16.msra.mxu0 0
        %582 = vmatprep.subr.bf16.mxu0 0
        %583 = vmatpush1.bf16.msra.mxu0 0
        %584 = vmatprep.subr.bf16.mxu0 0
        %585 = vmatpush1.bf16.msra.mxu0 0
        %586 = vmatprep.subr.bf16.mxu0 0
        %587 = vmatpush1.bf16.msra.mxu0 0
        %588 = vmatprep.subr.bf16.mxu0 0
        %589 = vmatpush1.bf16.msra.mxu0 0
        %590 = vmatprep.subr.bf16.mxu0 0
        %591 = vmatpush1.bf16.msra.mxu0 0
        %592 = vmatprep.subr.bf16.mxu0 0
        %593 = vmatpush1.bf16.msra.mxu0 0
        %594 = vmatprep.subr.bf16.mxu0 0
        %595 = vmatpush1.bf16.msra.mxu0 0
        %596 = vmatprep.subr.bf16.mxu0 0
        %597 = vmatpush1.bf16.msra.mxu0 0
        %598 = vmatprep.subr.bf16.mxu0 0
        %599 = vmatpush1.bf16.msra.mxu0 0
        %600 = vmatprep.mubr.bf16.mxu0 0
        %601 = vmatmul.mubr.bf16.gmra.mrb[0].mxu0 %v554
        %v602 = vpop.f32.mrb[0].mxu0
        %v603 = vadd.f32 %v506, %v602
        %v604 = vpop.f32.mrb[0].mxu0
        %v605 = vadd.f32 %v508, %v604
        %v606 = vpop.f32.mrb[0].mxu0
        %v607 = vpop.f32.mrb[0].mxu0
        %608 = vdwg.mxu0
        %609 = vmatprep.subr.bf16.mxu0 %v566
        %610 = vmatpush1.bf16.msra.mxu0 %v563
        %611 = vmatprep.subr.bf16.mxu0 0
        %612 = vmatpush1.bf16.msra.mxu0 0
        %613 = vmatprep.subr.bf16.mxu0 0
        %614 = vmatpush1.bf16.msra.mxu0 0
        %615 = vmatprep.subr.bf16.mxu0 0
        %616 = vmatpush1.bf16.msra.mxu0 0
        %617 = vmatprep.subr.bf16.mxu0 0
        %618 = vmatpush1.bf16.msra.mxu0 0
        %619 = vmatprep.subr.bf16.mxu0 0
        %620 = vmatpush1.bf16.msra.mxu0 0
        %621 = vmatprep.subr.bf16.mxu0 0
        %622 = vmatpush1.bf16.msra.mxu0 0
        %623 = vmatprep.subr.bf16.mxu0 0
        %624 = vmatpush1.bf16.msra.mxu0 0
        %625 = vmatprep.subr.bf16.mxu0 0
        %626 = vmatpush1.bf16.msra.mxu0 0
        %627 = vmatprep.subr.bf16.mxu0 0
        %628 = vmatpush1.bf16.msra.mxu0 0
        %629 = vmatprep.subr.bf16.mxu0 0
        %630 = vmatpush1.bf16.msra.mxu0 0
        %631 = vmatprep.subr.bf16.mxu0 0
        %632 = vmatpush1.bf16.msra.mxu0 0
        %633 = vmatprep.subr.bf16.mxu0 0
        %634 = vmatpush1.bf16.msra.mxu0 0
        %635 = vmatprep.subr.bf16.mxu0 0
        %636 = vmatpush1.bf16.msra.mxu0 0
        %637 = vmatprep.subr.bf16.mxu0 0
        %638 = vmatpush1.bf16.msra.mxu0 0
        %639 = vmatprep.subr.bf16.mxu0 0
        %640 = vmatpush1.bf16.msra.mxu0 0
        %641 = vmatprep.mubr.bf16.mxu0 0
        %642 = vmatmul.mubr.bf16.gmra.mrb[0].mxu0 %v554
        %v643 = vpop.f32.mrb[0].mxu0
        %v644 = vadd.f32 %v547, %v643
        %v645 = vpop.f32.mrb[0].mxu0
        %v646 = vadd.f32 %v549, %v645
        %v647 = vpop.f32.mrb[0].mxu0
        %v648 = vpop.f32.mrb[0].mxu0
        %649 = vdwg.mxu0
        %650 = vrot.lane.b32.xlu0 %v417, 108
        %v651 = vpop.permute.xlu0 %650
        %652 = vrot.lane.b32.xlu0 %v425, 108
        %v653 = vpop.permute.xlu0 %652
        %654 = vrot.lane.b32.xlu0 %v424, 108
        %v655 = vpop.permute.xlu0 %654
        %656 = vrot.lane.b32.xlu0 %v426, 108
        %v657 = vpop.permute.xlu0 %656
        %vm658 = vcmp.lt.s32.totalorder %v444, 108
        %v659 = vsel %vm658, %v655, %v657
        %v660 = vsel %vm658, %v653, %v655
        %v661 = vsel %vm658, %v651, %v653
        %v662 = vsel %vm658, %v657, %v651
        %v663 = vpack.c.bf16 %v661, %v661
        %v664 = vpack.c.bf16 %v660, %v660
        %v665 = vpack.c.bf16 %v659, %v659
        %v666 = vpack.c.bf16 %v662, %v662
        %v668 = vsel %vm454, %v389, 0
        %v671 = vsel %vm458, %v663, 0
        %v674 = vsel %vm458, %v664, 0
        %v677 = vsel %vm458, %v665, 0
        %v680 = vsel %vm458, %v666, 0
        %682 = vmatprep.subr.bf16.mxu0 %v674
        %683 = vmatpush1.bf16.msra.mxu0 %v671
        %684 = vmatprep.subr.bf16.mxu0 0
        %685 = vmatpush1.bf16.msra.mxu0 0
        %686 = vmatprep.subr.bf16.mxu0 0
        %687 = vmatpush1.bf16.msra.mxu0 0
        %688 = vmatprep.subr.bf16.mxu0 0
        %689 = vmatpush1.bf16.msra.mxu0 0
        %690 = vmatprep.subr.bf16.mxu0 0
        %691 = vmatpush1.bf16.msra.mxu0 0
        %692 = vmatprep.subr.bf16.mxu0 0
        %693 = vmatpush1.bf16.msra.mxu0 0
        %694 = vmatprep.subr.bf16.mxu0 0
        %695 = vmatpush1.bf16.msra.mxu0 0
        %696 = vmatprep.subr.bf16.mxu0 0
        %697 = vmatpush1.bf16.msra.mxu0 0
        %698 = vmatprep.subr.bf16.mxu0 0
        %699 = vmatpush1.bf16.msra.mxu0 0
        %700 = vmatprep.subr.bf16.mxu0 0
        %701 = vmatpush1.bf16.msra.mxu0 0
        %702 = vmatprep.subr.bf16.mxu0 0
        %703 = vmatpush1.bf16.msra.mxu0 0
        %704 = vmatprep.subr.bf16.mxu0 0
        %705 = vmatpush1.bf16.msra.mxu0 0
        %706 = vmatprep.subr.bf16.mxu0 0
        %707 = vmatpush1.bf16.msra.mxu0 0
        %708 = vmatprep.subr.bf16.mxu0 0
        %709 = vmatpush1.bf16.msra.mxu0 0
        %710 = vmatprep.subr.bf16.mxu0 0
        %711 = vmatpush1.bf16.msra.mxu0 0
        %712 = vmatprep.subr.bf16.mxu0 0
        %713 = vmatpush1.bf16.msra.mxu0 0
        %714 = vmatprep.mubr.bf16.mxu0 0
        %715 = vmatmul.mubr.bf16.gmra.mrb[0].mxu0 %v668
        %v716 = vpop.f32.mrb[0].mxu0
        %v717 = vadd.f32 0.0, %v716
        %v718 = vpop.f32.mrb[0].mxu0
        %v719 = vadd.f32 0.0, %v718
        %v720 = vpop.f32.mrb[0].mxu0
        %v721 = vpop.f32.mrb[0].mxu0
        %722 = vdwg.mxu0
        %723 = vmatprep.subr.bf16.mxu0 %v680
        %724 = vmatpush1.bf16.msra.mxu0 %v677
        %725 = vmatprep.subr.bf16.mxu0 0
        %726 = vmatpush1.bf16.msra.mxu0 0
        %727 = vmatprep.subr.bf16.mxu0 0
        %728 = vmatpush1.bf16.msra.mxu0 0
        %729 = vmatprep.subr.bf16.mxu0 0
        %730 = vmatpush1.bf16.msra.mxu0 0
        %731 = vmatprep.subr.bf16.mxu0 0
        %732 = vmatpush1.bf16.msra.mxu0 0
        %733 = vmatprep.subr.bf16.mxu0 0
        %734 = vmatpush1.bf16.msra.mxu0 0
        %735 = vmatprep.subr.bf16.mxu0 0
        %736 = vmatpush1.bf16.msra.mxu0 0
        %737 = vmatprep.subr.bf16.mxu0 0
        %738 = vmatpush1.bf16.msra.mxu0 0
        %739 = vmatprep.subr.bf16.mxu0 0
        %740 = vmatpush1.bf16.msra.mxu0 0
        %741 = vmatprep.subr.bf16.mxu0 0
        %742 = vmatpush1.bf16.msra.mxu0 0
        %743 = vmatprep.subr.bf16.mxu0 0
        %744 = vmatpush1.bf16.msra.mxu0 0
        %745 = vmatprep.subr.bf16.mxu0 0
        %746 = vmatpush1.bf16.msra.mxu0 0
        %747 = vmatprep.subr.bf16.mxu0 0
        %748 = vmatpush1.bf16.msra.mxu0 0
        %749 = vmatprep.subr.bf16.mxu0 0
        %750 = vmatpush1.bf16.msra.mxu0 0
        %751 = vmatprep.subr.bf16.mxu0 0
        %752 = vmatpush1.bf16.msra.mxu0 0
        %753 = vmatprep.subr.bf16.mxu0 0
        %754 = vmatpush1.bf16.msra.mxu0 0
        %755 = vmatprep.mubr.bf16.mxu0 0
        %756 = vmatmul.mubr.bf16.gmra.mrb[0].mxu0 %v668
        %v757 = vpop.f32.mrb[0].mxu0
        %v758 = vadd.f32 0.0, %v757
        %v759 = vpop.f32.mrb[0].mxu0
        %v760 = vadd.f32 0.0, %v759
        %v761 = vpop.f32.mrb[0].mxu0
        %v762 = vpop.f32.mrb[0].mxu0
        %763 = vdwg.mxu0
        %v764 = vadd.f32 %v603, %v717
        %v765 = vadd.f32 %v605, %v719
        %v766 = vadd.f32 %v644, %v758
        %v767 = vadd.f32 %v646, %v760
        %v769 = vlaneseq
        %v770 = vshrl.u32 %v769, 7
        %v771 = vsub.s32 0, %v770
        %v772 = vrot.slane %v383, %v771
        %v773 = vlaneseq
        %v774 = vshrl.u32 %v773, 7
        %v775 = vsub.s32 1, %v774
        %v776 = vrot.slane %v383, %v775
        %v777 = vlaneseq
        %v778 = vshrl.u32 %v777, 7
        %v779 = vsub.s32 2, %v778
        %v780 = vrot.slane %v383, %v779
        %v781 = vlaneseq
        %v782 = vshrl.u32 %v781, 7
        %v783 = vsub.s32 3, %v782
        %v784 = vrot.slane %v383, %v783
        %v789 = vmul.f32 %v764, %v772
        %v790 = vmul.f32 %v765, %v776
        %v791 = vmul.f32 %v766, %v780
        %v792 = vmul.f32 %v767, %v784
        %v793 = vmax.f32 %v789, 0.0
        %v794 = vmax.f32 %v790, 0.0
        %v795 = vmax.f32 %v791, 0.0
        %v796 = vmax.f32 %v792, 0.0
        %v797 = vpack.c.bf16 %v793, %v793
        %v798 = vpack.c.bf16 %v794, %v794
        %v799 = vpack.c.bf16 %v795, %v795
        %v800 = vpack.c.bf16 %v796, %v796
        %801 = vrot.lane.b32.xlu0 %v793, 1
        %v802 = vpop.permute.xlu0 %801
        %803 = vrot.lane.b32.xlu0 %v794, 1
        %v804 = vpop.permute.xlu0 %803
        %805 = vrot.lane.b32.xlu0 %v795, 1
        %v806 = vpop.permute.xlu0 %805
        %807 = vrot.lane.b32.xlu0 %v796, 1
        %v808 = vpop.permute.xlu0 %807
        %vm809 = vcmp.lt.s32.totalorder %v444, 1
        %v810 = vsel %vm809, %v806, %v808
        %v811 = vsel %vm809, %v804, %v806
        %v812 = vsel %vm809, %v802, %v804
        %v813 = vsel %vm809, %v808, %v802
        %v814 = vpack.c.bf16 %v813, %v813
        %v815 = vpack.c.bf16 %v812, %v812
        %v816 = vpack.c.bf16 %v811, %v811
        %v817 = vpack.c.bf16 %v810, %v810
        %v819 = vsel %vm454, %v393, 0
        %v822 = vsel %vm458, %v814, 0
        %v825 = vsel %vm458, %v815, 0
        %v828 = vsel %vm458, %v816, 0
        %v831 = vsel %vm458, %v817, 0
        %833 = vmatprep.subr.bf16.mxu0 %v825
        %834 = vmatpush1.bf16.msra.mxu0 %v822
        %835 = vmatprep.subr.bf16.mxu0 0
        %836 = vmatpush1.bf16.msra.mxu0 0
        %837 = vmatprep.subr.bf16.mxu0 0
        %838 = vmatpush1.bf16.msra.mxu0 0
        %839 = vmatprep.subr.bf16.mxu0 0
        %840 = vmatpush1.bf16.msra.mxu0 0
        %841 = vmatprep.subr.bf16.mxu0 0
        %842 = vmatpush1.bf16.msra.mxu0 0
        %843 = vmatprep.subr.bf16.mxu0 0
        %844 = vmatpush1.bf16.msra.mxu0 0
        %845 = vmatprep.subr.bf16.mxu0 0
        %846 = vmatpush1.bf16.msra.mxu0 0
        %847 = vmatprep.subr.bf16.mxu0 0
        %848 = vmatpush1.bf16.msra.mxu0 0
        %849 = vmatprep.subr.bf16.mxu0 0
        %850 = vmatpush1.bf16.msra.mxu0 0
        %851 = vmatprep.subr.bf16.mxu0 0
        %852 = vmatpush1.bf16.msra.mxu0 0
        %853 = vmatprep.subr.bf16.mxu0 0
        %854 = vmatpush1.bf16.msra.mxu0 0
        %855 = vmatprep.subr.bf16.mxu0 0
        %856 = vmatpush1.bf16.msra.mxu0 0
        %857 = vmatprep.subr.bf16.mxu0 0
        %858 = vmatpush1.bf16.msra.mxu0 0
        %859 = vmatprep.subr.bf16.mxu0 0
        %860 = vmatpush1.bf16.msra.mxu0 0
        %861 = vmatprep.subr.bf16.mxu0 0
        %862 = vmatpush1.bf16.msra.mxu0 0
        %863 = vmatprep.subr.bf16.mxu0 0
        %864 = vmatpush1.bf16.msra.mxu0 0
        %865 = vmatprep.mubr.bf16.mxu0 0
        %866 = vmatmul.mubr.bf16.gmra.mrb[0].mxu0 %v819
        %v867 = vpop.f32.mrb[0].mxu0
        %v868 = vadd.f32 0.0, %v867
        %v869 = vpop.f32.mrb[0].mxu0
        %v870 = vadd.f32 0.0, %v869
        %v871 = vpop.f32.mrb[0].mxu0
        %v872 = vpop.f32.mrb[0].mxu0
        %873 = vdwg.mxu0
        %874 = vmatprep.subr.bf16.mxu0 %v831
        %875 = vmatpush1.bf16.msra.mxu0 %v828
        %876 = vmatprep.subr.bf16.mxu0 0
        %877 = vmatpush1.bf16.msra.mxu0 0
        %878 = vmatprep.subr.bf16.mxu0 0
        %879 = vmatpush1.bf16.msra.mxu0 0
        %880 = vmatprep.subr.bf16.mxu0 0
        %881 = vmatpush1.bf16.msra.mxu0 0
        %882 = vmatprep.subr.bf16.mxu0 0
        %883 = vmatpush1.bf16.msra.mxu0 0
        %884 = vmatprep.subr.bf16.mxu0 0
        %885 = vmatpush1.bf16.msra.mxu0 0
        %886 = vmatprep.subr.bf16.mxu0 0
        %887 = vmatpush1.bf16.msra.mxu0 0
        %888 = vmatprep.subr.bf16.mxu0 0
        %889 = vmatpush1.bf16.msra.mxu0 0
        %890 = vmatprep.subr.bf16.mxu0 0
        %891 = vmatpush1.bf16.msra.mxu0 0
        %892 = vmatprep.subr.bf16.mxu0 0
        %893 = vmatpush1.bf16.msra.mxu0 0
        %894 = vmatprep.subr.bf16.mxu0 0
        %895 = vmatpush1.bf16.msra.mxu0 0
        %896 = vmatprep.subr.bf16.mxu0 0
        %897 = vmatpush1.bf16.msra.mxu0 0
        %898 = vmatprep.subr.bf16.mxu0 0
        %899 = vmatpush1.bf16.msra.mxu0 0
        %900 = vmatprep.subr.bf16.mxu0 0
        %901 = vmatpush1.bf16.msra.mxu0 0
        %902 = vmatprep.subr.bf16.mxu0 0
        %903 = vmatpush1.bf16.msra.mxu0 0
        %904 = vmatprep.subr.bf16.mxu0 0
        %905 = vmatpush1.bf16.msra.mxu0 0
        %906 = vmatprep.mubr.bf16.mxu0 0
        %907 = vmatmul.mubr.bf16.gmra.mrb[0].mxu0 %v819
        %v908 = vpop.f32.mrb[0].mxu0
        %v909 = vadd.f32 0.0, %v908
        %v910 = vpop.f32.mrb[0].mxu0
        %v911 = vadd.f32 0.0, %v910
        %v912 = vpop.f32.mrb[0].mxu0
        %v913 = vpop.f32.mrb[0].mxu0
        %914 = vdwg.mxu0
        %v916 = vsel %vm454, %v394, 0
        %v919 = vsel %vm458, %v797, 0
        %v922 = vsel %vm458, %v798, 0
        %v925 = vsel %vm458, %v799, 0
        %v928 = vsel %vm458, %v800, 0
        %930 = vmatprep.subr.bf16.mxu0 %v922
        %931 = vmatpush1.bf16.msra.mxu0 %v919
        %932 = vmatprep.subr.bf16.mxu0 0
        %933 = vmatpush1.bf16.msra.mxu0 0
        %934 = vmatprep.subr.bf16.mxu0 0
        %935 = vmatpush1.bf16.msra.mxu0 0
        %936 = vmatprep.subr.bf16.mxu0 0
        %937 = vmatpush1.bf16.msra.mxu0 0
        %938 = vmatprep.subr.bf16.mxu0 0
        %939 = vmatpush1.bf16.msra.mxu0 0
        %940 = vmatprep.subr.bf16.mxu0 0
        %941 = vmatpush1.bf16.msra.mxu0 0
        %942 = vmatprep.subr.bf16.mxu0 0
        %943 = vmatpush1.bf16.msra.mxu0 0
        %944 = vmatprep.subr.bf16.mxu0 0
        %945 = vmatpush1.bf16.msra.mxu0 0
        %946 = vmatprep.subr.bf16.mxu0 0
        %947 = vmatpush1.bf16.msra.mxu0 0
        %948 = vmatprep.subr.bf16.mxu0 0
        %949 = vmatpush1.bf16.msra.mxu0 0
        %950 = vmatprep.subr.bf16.mxu0 0
        %951 = vmatpush1.bf16.msra.mxu0 0
        %952 = vmatprep.subr.bf16.mxu0 0
        %953 = vmatpush1.bf16.msra.mxu0 0
        %954 = vmatprep.subr.bf16.mxu0 0
        %955 = vmatpush1.bf16.msra.mxu0 0
        %956 = vmatprep.subr.bf16.mxu0 0
        %957 = vmatpush1.bf16.msra.mxu0 0
        %958 = vmatprep.subr.bf16.mxu0 0
        %959 = vmatpush1.bf16.msra.mxu0 0
        %960 = vmatprep.subr.bf16.mxu0 0
        %961 = vmatpush1.bf16.msra.mxu0 0
        %962 = vmatprep.mubr.bf16.mxu0 0
        %963 = vmatmul.mubr.bf16.gmra.mrb[0].mxu0 %v916
        %v964 = vpop.f32.mrb[0].mxu0
        %v965 = vadd.f32 %v868, %v964
        %v966 = vpop.f32.mrb[0].mxu0
        %v967 = vadd.f32 %v870, %v966
        %v968 = vpop.f32.mrb[0].mxu0
        %v969 = vpop.f32.mrb[0].mxu0
        %970 = vdwg.mxu0
        %971 = vmatprep.subr.bf16.mxu0 %v928
        %972 = vmatpush1.bf16.msra.mxu0 %v925
        %973 = vmatprep.subr.bf16.mxu0 0
        %974 = vmatpush1.bf16.msra.mxu0 0
        %975 = vmatprep.subr.bf16.mxu0 0
        %976 = vmatpush1.bf16.msra.mxu0 0
        %977 = vmatprep.subr.bf16.mxu0 0
        %978 = vmatpush1.bf16.msra.mxu0 0
        %979 = vmatprep.subr.bf16.mxu0 0
        %980 = vmatpush1.bf16.msra.mxu0 0
        %981 = vmatprep.subr.bf16.mxu0 0
        %982 = vmatpush1.bf16.msra.mxu0 0
        %983 = vmatprep.subr.bf16.mxu0 0
        %984 = vmatpush1.bf16.msra.mxu0 0
        %985 = vmatprep.subr.bf16.mxu0 0
        %986 = vmatpush1.bf16.msra.mxu0 0
        %987 = vmatprep.subr.bf16.mxu0 0
        %988 = vmatpush1.bf16.msra.mxu0 0
        %989 = vmatprep.subr.bf16.mxu0 0
        %990 = vmatpush1.bf16.msra.mxu0 0
        %991 = vmatprep.subr.bf16.mxu0 0
        %992 = vmatpush1.bf16.msra.mxu0 0
        %993 = vmatprep.subr.bf16.mxu0 0
        %994 = vmatpush1.bf16.msra.mxu0 0
        %995 = vmatprep.subr.bf16.mxu0 0
        %996 = vmatpush1.bf16.msra.mxu0 0
        %997 = vmatprep.subr.bf16.mxu0 0
        %998 = vmatpush1.bf16.msra.mxu0 0
        %999 = vmatprep.subr.bf16.mxu0 0
        %1000 = vmatpush1.bf16.msra.mxu0 0
        %1001 = vmatprep.subr.bf16.mxu0 0
        %1002 = vmatpush1.bf16.msra.mxu0 0
        %1003 = vmatprep.mubr.bf16.mxu0 0
        %1004 = vmatmul.mubr.bf16.gmra.mrb[0].mxu0 %v916
        %v1005 = vpop.f32.mrb[0].mxu0
        %v1006 = vadd.f32 %v909, %v1005
        %v1007 = vpop.f32.mrb[0].mxu0
        %v1008 = vadd.f32 %v911, %v1007
        %v1009 = vpop.f32.mrb[0].mxu0
        %v1010 = vpop.f32.mrb[0].mxu0
        %1011 = vdwg.mxu0
        %1012 = vrot.lane.b32.xlu0 %v793, 127
        %v1013 = vpop.permute.xlu0 %1012
        %1014 = vrot.lane.b32.xlu0 %v794, 127
        %v1015 = vpop.permute.xlu0 %1014
        %1016 = vrot.lane.b32.xlu0 %v795, 127
        %v1017 = vpop.permute.xlu0 %1016
        %1018 = vrot.lane.b32.xlu0 %v796, 127
        %v1019 = vpop.permute.xlu0 %1018
        %vm1020 = vcmp.lt.s32.totalorder %v444, 127
        %v1021 = vsel %vm1020, %v1017, %v1019
        %v1022 = vsel %vm1020, %v1015, %v1017
        %v1023 = vsel %vm1020, %v1013, %v1015
        %v1024 = vsel %vm1020, %v1019, %v1013
        %v1025 = vpack.c.bf16 %v1023, %v1023
        %v1026 = vpack.c.bf16 %v1022, %v1022
        %v1027 = vpack.c.bf16 %v1021, %v1021
        %v1028 = vpack.c.bf16 %v1024, %v1024
        %v1030 = vsel %vm454, %v395, 0
        %v1033 = vsel %vm458, %v1025, 0
        %v1036 = vsel %vm458, %v1026, 0
        %v1039 = vsel %vm458, %v1027, 0
        %v1042 = vsel %vm458, %v1028, 0
        %1044 = vmatprep.subr.bf16.mxu0 %v1036
        %1045 = vmatpush1.bf16.msra.mxu0 %v1033
        %1046 = vmatprep.subr.bf16.mxu0 0
        %1047 = vmatpush1.bf16.msra.mxu0 0
        %1048 = vmatprep.subr.bf16.mxu0 0
        %1049 = vmatpush1.bf16.msra.mxu0 0
        %1050 = vmatprep.subr.bf16.mxu0 0
        %1051 = vmatpush1.bf16.msra.mxu0 0
        %1052 = vmatprep.subr.bf16.mxu0 0
        %1053 = vmatpush1.bf16.msra.mxu0 0
        %1054 = vmatprep.subr.bf16.mxu0 0
        %1055 = vmatpush1.bf16.msra.mxu0 0
        %1056 = vmatprep.subr.bf16.mxu0 0
        %1057 = vmatpush1.bf16.msra.mxu0 0
        %1058 = vmatprep.subr.bf16.mxu0 0
        %1059 = vmatpush1.bf16.msra.mxu0 0
        %1060 = vmatprep.subr.bf16.mxu0 0
        %1061 = vmatpush1.bf16.msra.mxu0 0
        %1062 = vmatprep.subr.bf16.mxu0 0
        %1063 = vmatpush1.bf16.msra.mxu0 0
        %1064 = vmatprep.subr.bf16.mxu0 0
        %1065 = vmatpush1.bf16.msra.mxu0 0
        %1066 = vmatprep.subr.bf16.mxu0 0
        %1067 = vmatpush1.bf16.msra.mxu0 0
        %1068 = vmatprep.subr.bf16.mxu0 0
        %1069 = vmatpush1.bf16.msra.mxu0 0
        %1070 = vmatprep.subr.bf16.mxu0 0
        %1071 = vmatpush1.bf16.msra.mxu0 0
        %1072 = vmatprep.subr.bf16.mxu0 0
        %1073 = vmatpush1.bf16.msra.mxu0 0
        %1074 = vmatprep.subr.bf16.mxu0 0
        %1075 = vmatpush1.bf16.msra.mxu0 0
        %1076 = vmatprep.mubr.bf16.mxu0 0
        %1077 = vmatmul.mubr.bf16.gmra.mrb[0].mxu0 %v1030
        %v1078 = vpop.f32.mrb[0].mxu0
        %v1079 = vadd.f32 0.0, %v1078
        %v1080 = vpop.f32.mrb[0].mxu0
        %v1081 = vadd.f32 0.0, %v1080
        %v1082 = vpop.f32.mrb[0].mxu0
        %v1083 = vpop.f32.mrb[0].mxu0
        %1084 = vdwg.mxu0
        %1085 = vmatprep.subr.bf16.mxu0 %v1042
        %1086 = vmatpush1.bf16.msra.mxu0 %v1039
        %1087 = vmatprep.subr.bf16.mxu0 0
        %1088 = vmatpush1.bf16.msra.mxu0 0
        %1089 = vmatprep.subr.bf16.mxu0 0
        %1090 = vmatpush1.bf16.msra.mxu0 0
        %1091 = vmatprep.subr.bf16.mxu0 0
        %1092 = vmatpush1.bf16.msra.mxu0 0
        %1093 = vmatprep.subr.bf16.mxu0 0
        %1094 = vmatpush1.bf16.msra.mxu0 0
        %1095 = vmatprep.subr.bf16.mxu0 0
        %1096 = vmatpush1.bf16.msra.mxu0 0
        %1097 = vmatprep.subr.bf16.mxu0 0
        %1098 = vmatpush1.bf16.msra.mxu0 0
        %1099 = vmatprep.subr.bf16.mxu0 0
        %1100 = vmatpush1.bf16.msra.mxu0 0
        %1101 = vmatprep.subr.bf16.mxu0 0
        %1102 = vmatpush1.bf16.msra.mxu0 0
        %1103 = vmatprep.subr.bf16.mxu0 0
        %1104 = vmatpush1.bf16.msra.mxu0 0
        %1105 = vmatprep.subr.bf16.mxu0 0
        %1106 = vmatpush1.bf16.msra.mxu0 0
        %1107 = vmatprep.subr.bf16.mxu0 0
        %1108 = vmatpush1.bf16.msra.mxu0 0
        %1109 = vmatprep.subr.bf16.mxu0 0
        %1110 = vmatpush1.bf16.msra.mxu0 0
        %1111 = vmatprep.subr.bf16.mxu0 0
        %1112 = vmatpush1.bf16.msra.mxu0 0
        %1113 = vmatprep.subr.bf16.mxu0 0
        %1114 = vmatpush1.bf16.msra.mxu0 0
        %1115 = vmatprep.subr.bf16.mxu0 0
        %1116 = vmatpush1.bf16.msra.mxu0 0
        %1117 = vmatprep.mubr.bf16.mxu0 0
        %1118 = vmatmul.mubr.bf16.gmra.mrb[0].mxu0 %v1030
        %v1119 = vpop.f32.mrb[0].mxu0
        %v1120 = vadd.f32 0.0, %v1119
        %v1121 = vpop.f32.mrb[0].mxu0
        %v1122 = vadd.f32 0.0, %v1121
        %v1123 = vpop.f32.mrb[0].mxu0
        %v1124 = vpop.f32.mrb[0].mxu0
        %1125 = vdwg.mxu0
        %v1126 = vadd.f32 %v965, %v1079
        %v1127 = vadd.f32 %v967, %v1081
        %v1128 = vadd.f32 %v1006, %v1120
        %v1129 = vadd.f32 %v1008, %v1122
        %v1130 = vmul.f32 %v1126, %v772
        %v1131 = vmul.f32 %v1127, %v776
        %v1132 = vmul.f32 %v1128, %v780
        %v1133 = vmul.f32 %v1129, %v784
        %v1134 = vld [vmem:[%s381] sm:$0xff]
        %v1136 = vcombine.high %v1134, %v1134
        %v1138 = vunpack.c.l.s4 1983009808
        %v1139 = vunpack.c.0.s8 %v1138
        %v1140 = vlaneseq
        %v1141 = vshrl.u32 %v1140, 7
        %v1142 = vsub.s32 %v1139, %v1141
        %v1143 = vrot.slane %v1134, %v1142
        %v1145 = vunpack.c.l.s4 1983009808
        %v1146 = vunpack.c.0.s8 %v1145
        %v1147 = vlaneseq
        %v1148 = vshrl.u32 %v1147, 7
        %v1149 = vsub.s32 %v1146, %v1148
        %v1150 = vrot.slane %v1136, %v1149
        %v1151 = vcombine.high %v1143, %v1143
        %v1152 = vcombine.high %v1150, %v1150
        %v1157 = vpack.c.bf16 %v1143, %v1143
        %v1158 = vpack.c.bf16 %v1151, %v1151
        %v1159 = vpack.c.bf16 %v1150, %v1150
        %v1160 = vpack.c.bf16 %v1152, %v1152
        %1161 = vrot.lane.b32.xlu0 %v1143, 1
        %v1162 = vpop.permute.xlu0 %1161
        %1163 = vrot.lane.b32.xlu0 %v1151, 1
        %v1164 = vpop.permute.xlu0 %1163
        %1165 = vrot.lane.b32.xlu0 %v1150, 1
        %v1166 = vpop.permute.xlu0 %1165
        %1167 = vrot.lane.b32.xlu0 %v1152, 1
        %v1168 = vpop.permute.xlu0 %1167
        %v1169 = vsel %vm809, %v1166, %v1168
        %v1170 = vsel %vm809, %v1164, %v1166
        %v1171 = vsel %vm809, %v1162, %v1164
        %v1172 = vsel %vm809, %v1168, %v1162
        %v1173 = vpack.c.bf16 %v1172, %v1172
        %v1174 = vpack.c.bf16 %v1171, %v1171
        %v1175 = vpack.c.bf16 %v1170, %v1170
        %v1176 = vpack.c.bf16 %v1169, %v1169
        %v1178 = vsel %vm454, %v399, 0
        %v1181 = vsel %vm458, %v1173, 0
        %v1184 = vsel %vm458, %v1174, 0
        %v1187 = vsel %vm458, %v1175, 0
        %v1190 = vsel %vm458, %v1176, 0
        %1192 = vmatprep.subr.bf16.mxu0 %v1184
        %1193 = vmatpush1.bf16.msra.mxu0 %v1181
        %1194 = vmatprep.subr.bf16.mxu0 0
        %1195 = vmatpush1.bf16.msra.mxu0 0
        %1196 = vmatprep.subr.bf16.mxu0 0
        %1197 = vmatpush1.bf16.msra.mxu0 0
        %1198 = vmatprep.subr.bf16.mxu0 0
        %1199 = vmatpush1.bf16.msra.mxu0 0
        %1200 = vmatprep.subr.bf16.mxu0 0
        %1201 = vmatpush1.bf16.msra.mxu0 0
        %1202 = vmatprep.subr.bf16.mxu0 0
        %1203 = vmatpush1.bf16.msra.mxu0 0
        %1204 = vmatprep.subr.bf16.mxu0 0
        %1205 = vmatpush1.bf16.msra.mxu0 0
        %1206 = vmatprep.subr.bf16.mxu0 0
        %1207 = vmatpush1.bf16.msra.mxu0 0
        %1208 = vmatprep.subr.bf16.mxu0 0
        %1209 = vmatpush1.bf16.msra.mxu0 0
        %1210 = vmatprep.subr.bf16.mxu0 0
        %1211 = vmatpush1.bf16.msra.mxu0 0
        %1212 = vmatprep.subr.bf16.mxu0 0
        %1213 = vmatpush1.bf16.msra.mxu0 0
        %1214 = vmatprep.subr.bf16.mxu0 0
        %1215 = vmatpush1.bf16.msra.mxu0 0
        %1216 = vmatprep.subr.bf16.mxu0 0
        %1217 = vmatpush1.bf16.msra.mxu0 0
        %1218 = vmatprep.subr.bf16.mxu0 0
        %1219 = vmatpush1.bf16.msra.mxu0 0
        %1220 = vmatprep.subr.bf16.mxu0 0
        %1221 = vmatpush1.bf16.msra.mxu0 0
        %1222 = vmatprep.subr.bf16.mxu0 0
        %1223 = vmatpush1.bf16.msra.mxu0 0
        %1224 = vmatprep.mubr.bf16.mxu0 0
        %1225 = vmatmul.mubr.bf16.gmra.mrb[0].mxu0 %v1178
        %v1226 = vpop.f32.mrb[0].mxu0
        %v1227 = vadd.f32 0.0, %v1226
        %v1228 = vpop.f32.mrb[0].mxu0
        %v1229 = vadd.f32 0.0, %v1228
        %v1230 = vpop.f32.mrb[0].mxu0
        %v1231 = vpop.f32.mrb[0].mxu0
        %1232 = vdwg.mxu0
        %1233 = vmatprep.subr.bf16.mxu0 %v1190
        %1234 = vmatpush1.bf16.msra.mxu0 %v1187
        %1235 = vmatprep.subr.bf16.mxu0 0
        %1236 = vmatpush1.bf16.msra.mxu0 0
        %1237 = vmatprep.subr.bf16.mxu0 0
        %1238 = vmatpush1.bf16.msra.mxu0 0
        %1239 = vmatprep.subr.bf16.mxu0 0
        %1240 = vmatpush1.bf16.msra.mxu0 0
        %1241 = vmatprep.subr.bf16.mxu0 0
        %1242 = vmatpush1.bf16.msra.mxu0 0
        %1243 = vmatprep.subr.bf16.mxu0 0
        %1244 = vmatpush1.bf16.msra.mxu0 0
        %1245 = vmatprep.subr.bf16.mxu0 0
        %1246 = vmatpush1.bf16.msra.mxu0 0
        %1247 = vmatprep.subr.bf16.mxu0 0
        %1248 = vmatpush1.bf16.msra.mxu0 0
        %1249 = vmatprep.subr.bf16.mxu0 0
        %1250 = vmatpush1.bf16.msra.mxu0 0
        %1251 = vmatprep.subr.bf16.mxu0 0
        %1252 = vmatpush1.bf16.msra.mxu0 0
        %1253 = vmatprep.subr.bf16.mxu0 0
        %1254 = vmatpush1.bf16.msra.mxu0 0
        %1255 = vmatprep.subr.bf16.mxu0 0
        %1256 = vmatpush1.bf16.msra.mxu0 0
        %1257 = vmatprep.subr.bf16.mxu0 0
        %1258 = vmatpush1.bf16.msra.mxu0 0
        %1259 = vmatprep.subr.bf16.mxu0 0
        %1260 = vmatpush1.bf16.msra.mxu0 0
        %1261 = vmatprep.subr.bf16.mxu0 0
        %1262 = vmatpush1.bf16.msra.mxu0 0
        %1263 = vmatprep.subr.bf16.mxu0 0
        %1264 = vmatpush1.bf16.msra.mxu0 0
        %1265 = vmatprep.mubr.bf16.mxu0 0
        %1266 = vmatmul.mubr.bf16.gmra.mrb[0].mxu0 %v1178
        %v1267 = vpop.f32.mrb[0].mxu0
        %v1268 = vadd.f32 0.0, %v1267
        %v1269 = vpop.f32.mrb[0].mxu0
        %v1270 = vadd.f32 0.0, %v1269
        %v1271 = vpop.f32.mrb[0].mxu0
        %v1272 = vpop.f32.mrb[0].mxu0
        %1273 = vdwg.mxu0
        %v1275 = vsel %vm454, %v400, 0
        %v1278 = vsel %vm458, %v1157, 0
        %v1281 = vsel %vm458, %v1158, 0
        %v1284 = vsel %vm458, %v1159, 0
        %v1287 = vsel %vm458, %v1160, 0
        %1289 = vmatprep.subr.bf16.mxu0 %v1281
        %1290 = vmatpush1.bf16.msra.mxu0 %v1278
        %1291 = vmatprep.subr.bf16.mxu0 0
        %1292 = vmatpush1.bf16.msra.mxu0 0
        %1293 = vmatprep.subr.bf16.mxu0 0
        %1294 = vmatpush1.bf16.msra.mxu0 0
        %1295 = vmatprep.subr.bf16.mxu0 0
        %1296 = vmatpush1.bf16.msra.mxu0 0
        %1297 = vmatprep.subr.bf16.mxu0 0
        %1298 = vmatpush1.bf16.msra.mxu0 0
        %1299 = vmatprep.subr.bf16.mxu0 0
        %1300 = vmatpush1.bf16.msra.mxu0 0
        %1301 = vmatprep.subr.bf16.mxu0 0
        %1302 = vmatpush1.bf16.msra.mxu0 0
        %1303 = vmatprep.subr.bf16.mxu0 0
        %1304 = vmatpush1.bf16.msra.mxu0 0
        %1305 = vmatprep.subr.bf16.mxu0 0
        %1306 = vmatpush1.bf16.msra.mxu0 0
        %1307 = vmatprep.subr.bf16.mxu0 0
        %1308 = vmatpush1.bf16.msra.mxu0 0
        %1309 = vmatprep.subr.bf16.mxu0 0
        %1310 = vmatpush1.bf16.msra.mxu0 0
        %1311 = vmatprep.subr.bf16.mxu0 0
        %1312 = vmatpush1.bf16.msra.mxu0 0
        %1313 = vmatprep.subr.bf16.mxu0 0
        %1314 = vmatpush1.bf16.msra.mxu0 0
        %1315 = vmatprep.subr.bf16.mxu0 0
        %1316 = vmatpush1.bf16.msra.mxu0 0
        %1317 = vmatprep.subr.bf16.mxu0 0
        %1318 = vmatpush1.bf16.msra.mxu0 0
        %1319 = vmatprep.subr.bf16.mxu0 0
        %1320 = vmatpush1.bf16.msra.mxu0 0
        %1321 = vmatprep.mubr.bf16.mxu0 0
        %1322 = vmatmul.mubr.bf16.gmra.mrb[0].mxu0 %v1275
        %v1323 = vpop.f32.mrb[0].mxu0
        %v1324 = vadd.f32 %v1227, %v1323
        %v1325 = vpop.f32.mrb[0].mxu0
        %v1326 = vadd.f32 %v1229, %v1325
        %v1327 = vpop.f32.mrb[0].mxu0
        %v1328 = vpop.f32.mrb[0].mxu0
        %1329 = vdwg.mxu0
        %1330 = vmatprep.subr.bf16.mxu0 %v1287
        %1331 = vmatpush1.bf16.msra.mxu0 %v1284
        %1332 = vmatprep.subr.bf16.mxu0 0
        %1333 = vmatpush1.bf16.msra.mxu0 0
        %1334 = vmatprep.subr.bf16.mxu0 0
        %1335 = vmatpush1.bf16.msra.mxu0 0
        %1336 = vmatprep.subr.bf16.mxu0 0
        %1337 = vmatpush1.bf16.msra.mxu0 0
        %1338 = vmatprep.subr.bf16.mxu0 0
        %1339 = vmatpush1.bf16.msra.mxu0 0
        %1340 = vmatprep.subr.bf16.mxu0 0
        %1341 = vmatpush1.bf16.msra.mxu0 0
        %1342 = vmatprep.subr.bf16.mxu0 0
        %1343 = vmatpush1.bf16.msra.mxu0 0
        %1344 = vmatprep.subr.bf16.mxu0 0
        %1345 = vmatpush1.bf16.msra.mxu0 0
        %1346 = vmatprep.subr.bf16.mxu0 0
        %1347 = vmatpush1.bf16.msra.mxu0 0
        %1348 = vmatprep.subr.bf16.mxu0 0
        %1349 = vmatpush1.bf16.msra.mxu0 0
        %1350 = vmatprep.subr.bf16.mxu0 0
        %1351 = vmatpush1.bf16.msra.mxu0 0
        %1352 = vmatprep.subr.bf16.mxu0 0
        %1353 = vmatpush1.bf16.msra.mxu0 0
        %1354 = vmatprep.subr.bf16.mxu0 0
        %1355 = vmatpush1.bf16.msra.mxu0 0
        %1356 = vmatprep.subr.bf16.mxu0 0
        %1357 = vmatpush1.bf16.msra.mxu0 0
        %1358 = vmatprep.subr.bf16.mxu0 0
        %1359 = vmatpush1.bf16.msra.mxu0 0
        %1360 = vmatprep.subr.bf16.mxu0 0
        %1361 = vmatpush1.bf16.msra.mxu0 0
        %1362 = vmatprep.mubr.bf16.mxu0 0
        %1363 = vmatmul.mubr.bf16.gmra.mrb[0].mxu0 %v1275
        %v1364 = vpop.f32.mrb[0].mxu0
        %v1365 = vadd.f32 %v1268, %v1364
        %v1366 = vpop.f32.mrb[0].mxu0
        %v1367 = vadd.f32 %v1270, %v1366
        %v1368 = vpop.f32.mrb[0].mxu0
        %v1369 = vpop.f32.mrb[0].mxu0
        %1370 = vdwg.mxu0
        %1371 = vrot.lane.b32.xlu0 %v1143, 127
        %v1372 = vpop.permute.xlu0 %1371
        %1373 = vrot.lane.b32.xlu0 %v1151, 127
        %v1374 = vpop.permute.xlu0 %1373
        %1375 = vrot.lane.b32.xlu0 %v1150, 127
        %v1376 = vpop.permute.xlu0 %1375
        %1377 = vrot.lane.b32.xlu0 %v1152, 127
        %v1378 = vpop.permute.xlu0 %1377
        %v1379 = vsel %vm1020, %v1376, %v1378
        %v1380 = vsel %vm1020, %v1374, %v1376
        %v1381 = vsel %vm1020, %v1372, %v1374
        %v1382 = vsel %vm1020, %v1378, %v1372
        %v1383 = vpack.c.bf16 %v1381, %v1381
        %v1384 = vpack.c.bf16 %v1380, %v1380
        %v1385 = vpack.c.bf16 %v1379, %v1379
        %v1386 = vpack.c.bf16 %v1382, %v1382
        %v1388 = vsel %vm454, %v401, 0
        %v1391 = vsel %vm458, %v1383, 0
        %v1394 = vsel %vm458, %v1384, 0
        %v1397 = vsel %vm458, %v1385, 0
        %v1400 = vsel %vm458, %v1386, 0
        %1402 = vmatprep.subr.bf16.mxu0 %v1394
        %1403 = vmatpush1.bf16.msra.mxu0 %v1391
        %1404 = vmatprep.subr.bf16.mxu0 0
        %1405 = vmatpush1.bf16.msra.mxu0 0
        %1406 = vmatprep.subr.bf16.mxu0 0
        %1407 = vmatpush1.bf16.msra.mxu0 0
        %1408 = vmatprep.subr.bf16.mxu0 0
        %1409 = vmatpush1.bf16.msra.mxu0 0
        %1410 = vmatprep.subr.bf16.mxu0 0
        %1411 = vmatpush1.bf16.msra.mxu0 0
        %1412 = vmatprep.subr.bf16.mxu0 0
        %1413 = vmatpush1.bf16.msra.mxu0 0
        %1414 = vmatprep.subr.bf16.mxu0 0
        %1415 = vmatpush1.bf16.msra.mxu0 0
        %1416 = vmatprep.subr.bf16.mxu0 0
        %1417 = vmatpush1.bf16.msra.mxu0 0
        %1418 = vmatprep.subr.bf16.mxu0 0
        %1419 = vmatpush1.bf16.msra.mxu0 0
        %1420 = vmatprep.subr.bf16.mxu0 0
        %1421 = vmatpush1.bf16.msra.mxu0 0
        %1422 = vmatprep.subr.bf16.mxu0 0
        %1423 = vmatpush1.bf16.msra.mxu0 0
        %1424 = vmatprep.subr.bf16.mxu0 0
        %1425 = vmatpush1.bf16.msra.mxu0 0
        %1426 = vmatprep.subr.bf16.mxu0 0
        %1427 = vmatpush1.bf16.msra.mxu0 0
        %1428 = vmatprep.subr.bf16.mxu0 0
        %1429 = vmatpush1.bf16.msra.mxu0 0
        %1430 = vmatprep.subr.bf16.mxu0 0
        %1431 = vmatpush1.bf16.msra.mxu0 0
        %1432 = vmatprep.subr.bf16.mxu0 0
        %1433 = vmatpush1.bf16.msra.mxu0 0
        %1434 = vmatprep.mubr.bf16.mxu0 0
        %1435 = vmatmul.mubr.bf16.gmra.mrb[0].mxu0 %v1388
        %v1436 = vpop.f32.mrb[0].mxu0
        %v1437 = vadd.f32 0.0, %v1436
        %v1438 = vpop.f32.mrb[0].mxu0
        %v1439 = vadd.f32 0.0, %v1438
        %v1440 = vpop.f32.mrb[0].mxu0
        %v1441 = vpop.f32.mrb[0].mxu0
        %1442 = vdwg.mxu0
        %1443 = vmatprep.subr.bf16.mxu0 %v1400
        %1444 = vmatpush1.bf16.msra.mxu0 %v1397
        %1445 = vmatprep.subr.bf16.mxu0 0
        %1446 = vmatpush1.bf16.msra.mxu0 0
        %1447 = vmatprep.subr.bf16.mxu0 0
        %1448 = vmatpush1.bf16.msra.mxu0 0
        %1449 = vmatprep.subr.bf16.mxu0 0
        %1450 = vmatpush1.bf16.msra.mxu0 0
        %1451 = vmatprep.subr.bf16.mxu0 0
        %1452 = vmatpush1.bf16.msra.mxu0 0
        %1453 = vmatprep.subr.bf16.mxu0 0
        %1454 = vmatpush1.bf16.msra.mxu0 0
        %1455 = vmatprep.subr.bf16.mxu0 0
        %1456 = vmatpush1.bf16.msra.mxu0 0
        %1457 = vmatprep.subr.bf16.mxu0 0
        %1458 = vmatpush1.bf16.msra.mxu0 0
        %1459 = vmatprep.subr.bf16.mxu0 0
        %1460 = vmatpush1.bf16.msra.mxu0 0
        %1461 = vmatprep.subr.bf16.mxu0 0
        %1462 = vmatpush1.bf16.msra.mxu0 0
        %1463 = vmatprep.subr.bf16.mxu0 0
        %1464 = vmatpush1.bf16.msra.mxu0 0
        %1465 = vmatprep.subr.bf16.mxu0 0
        %1466 = vmatpush1.bf16.msra.mxu0 0
        %1467 = vmatprep.subr.bf16.mxu0 0
        %1468 = vmatpush1.bf16.msra.mxu0 0
        %1469 = vmatprep.subr.bf16.mxu0 0
        %1470 = vmatpush1.bf16.msra.mxu0 0
        %1471 = vmatprep.subr.bf16.mxu0 0
        %1472 = vmatpush1.bf16.msra.mxu0 0
        %1473 = vmatprep.subr.bf16.mxu0 0
        %1474 = vmatpush1.bf16.msra.mxu0 0
        %1475 = vmatprep.mubr.bf16.mxu0 0
        %1476 = vmatmul.mubr.bf16.gmra.mrb[0].mxu0 %v1388
        %v1477 = vpop.f32.mrb[0].mxu0
        %v1478 = vadd.f32 0.0, %v1477
        %v1479 = vpop.f32.mrb[0].mxu0
        %v1480 = vadd.f32 0.0, %v1479
        %v1481 = vpop.f32.mrb[0].mxu0
        %v1482 = vpop.f32.mrb[0].mxu0
        %1483 = vdwg.mxu0
        %v1484 = vadd.f32 %v1324, %v1437
        %v1485 = vadd.f32 %v1326, %v1439
        %v1486 = vadd.f32 %v1365, %v1478
        %v1487 = vadd.f32 %v1367, %v1480
        %v1488 = vmul.f32 %v1484, %v772
        %v1489 = vmul.f32 %v1485, %v776
        %v1490 = vmul.f32 %v1486, %v780
        %v1491 = vmul.f32 %v1487, %v784
        %v1492 = vmax.f32 %v1488, 0.0
        %v1493 = vmax.f32 %v1489, 0.0
        %v1494 = vmax.f32 %v1490, 0.0
        %v1495 = vmax.f32 %v1491, 0.0
        %v1496 = vpack.c.bf16 %v1492, %v1492
        %v1497 = vpack.c.bf16 %v1493, %v1493
        %v1498 = vpack.c.bf16 %v1494, %v1494
        %v1499 = vpack.c.bf16 %v1495, %v1495
        %1500 = vrot.lane.b32.xlu0 %v1492, 20
        %v1501 = vpop.permute.xlu0 %1500
        %1502 = vrot.lane.b32.xlu0 %v1493, 20
        %v1503 = vpop.permute.xlu0 %1502
        %1504 = vrot.lane.b32.xlu0 %v1494, 20
        %v1505 = vpop.permute.xlu0 %1504
        %1506 = vrot.lane.b32.xlu0 %v1495, 20
        %v1507 = vpop.permute.xlu0 %1506
        %v1508 = vsel %vm445, %v1505, %v1507
        %v1509 = vsel %vm445, %v1503, %v1505
        %v1510 = vsel %vm445, %v1501, %v1503
        %v1511 = vsel %vm445, %v1507, %v1501
        %v1512 = vpack.c.bf16 %v1511, %v1511
        %v1513 = vpack.c.bf16 %v1510, %v1510
        %v1514 = vpack.c.bf16 %v1509, %v1509
        %v1515 = vpack.c.bf16 %v1508, %v1508
        %v1517 = vsel %vm454, %v405, 0
        %v1520 = vsel %vm458, %v1512, 0
        %v1523 = vsel %vm458, %v1513, 0
        %v1526 = vsel %vm458, %v1514, 0
        %v1529 = vsel %vm458, %v1515, 0
        %1531 = vmatprep.subr.bf16.mxu0 %v1523
        %1532 = vmatpush1.bf16.msra.mxu0 %v1520
        %1533 = vmatprep.subr.bf16.mxu0 0
        %1534 = vmatpush1.bf16.msra.mxu0 0
        %1535 = vmatprep.subr.bf16.mxu0 0
        %1536 = vmatpush1.bf16.msra.mxu0 0
        %1537 = vmatprep.subr.bf16.mxu0 0
        %1538 = vmatpush1.bf16.msra.mxu0 0
        %1539 = vmatprep.subr.bf16.mxu0 0
        %1540 = vmatpush1.bf16.msra.mxu0 0
        %1541 = vmatprep.subr.bf16.mxu0 0
        %1542 = vmatpush1.bf16.msra.mxu0 0
        %1543 = vmatprep.subr.bf16.mxu0 0
        %1544 = vmatpush1.bf16.msra.mxu0 0
        %1545 = vmatprep.subr.bf16.mxu0 0
        %1546 = vmatpush1.bf16.msra.mxu0 0
        %1547 = vmatprep.subr.bf16.mxu0 0
        %1548 = vmatpush1.bf16.msra.mxu0 0
        %1549 = vmatprep.subr.bf16.mxu0 0
        %1550 = vmatpush1.bf16.msra.mxu0 0
        %1551 = vmatprep.subr.bf16.mxu0 0
        %1552 = vmatpush1.bf16.msra.mxu0 0
        %1553 = vmatprep.subr.bf16.mxu0 0
        %1554 = vmatpush1.bf16.msra.mxu0 0
        %1555 = vmatprep.subr.bf16.mxu0 0
        %1556 = vmatpush1.bf16.msra.mxu0 0
        %1557 = vmatprep.subr.bf16.mxu0 0
        %1558 = vmatpush1.bf16.msra.mxu0 0
        %1559 = vmatprep.subr.bf16.mxu0 0
        %1560 = vmatpush1.bf16.msra.mxu0 0
        %1561 = vmatprep.subr.bf16.mxu0 0
        %1562 = vmatpush1.bf16.msra.mxu0 0
        %1563 = vmatprep.mubr.bf16.mxu0 0
        %1564 = vmatmul.mubr.bf16.gmra.mrb[0].mxu0 %v1517
        %v1565 = vpop.f32.mrb[0].mxu0
        %v1566 = vadd.f32 0.0, %v1565
        %v1567 = vpop.f32.mrb[0].mxu0
        %v1568 = vadd.f32 0.0, %v1567
        %v1569 = vpop.f32.mrb[0].mxu0
        %v1570 = vpop.f32.mrb[0].mxu0
        %1571 = vdwg.mxu0
        %1572 = vmatprep.subr.bf16.mxu0 %v1529
        %1573 = vmatpush1.bf16.msra.mxu0 %v1526
        %1574 = vmatprep.subr.bf16.mxu0 0
        %1575 = vmatpush1.bf16.msra.mxu0 0
        %1576 = vmatprep.subr.bf16.mxu0 0
        %1577 = vmatpush1.bf16.msra.mxu0 0
        %1578 = vmatprep.subr.bf16.mxu0 0
        %1579 = vmatpush1.bf16.msra.mxu0 0
        %1580 = vmatprep.subr.bf16.mxu0 0
        %1581 = vmatpush1.bf16.msra.mxu0 0
        %1582 = vmatprep.subr.bf16.mxu0 0
        %1583 = vmatpush1.bf16.msra.mxu0 0
        %1584 = vmatprep.subr.bf16.mxu0 0
        %1585 = vmatpush1.bf16.msra.mxu0 0
        %1586 = vmatprep.subr.bf16.mxu0 0
        %1587 = vmatpush1.bf16.msra.mxu0 0
        %1588 = vmatprep.subr.bf16.mxu0 0
        %1589 = vmatpush1.bf16.msra.mxu0 0
        %1590 = vmatprep.subr.bf16.mxu0 0
        %1591 = vmatpush1.bf16.msra.mxu0 0
        %1592 = vmatprep.subr.bf16.mxu0 0
        %1593 = vmatpush1.bf16.msra.mxu0 0
        %1594 = vmatprep.subr.bf16.mxu0 0
        %1595 = vmatpush1.bf16.msra.mxu0 0
        %1596 = vmatprep.subr.bf16.mxu0 0
        %1597 = vmatpush1.bf16.msra.mxu0 0
        %1598 = vmatprep.subr.bf16.mxu0 0
        %1599 = vmatpush1.bf16.msra.mxu0 0
        %1600 = vmatprep.subr.bf16.mxu0 0
        %1601 = vmatpush1.bf16.msra.mxu0 0
        %1602 = vmatprep.subr.bf16.mxu0 0
        %1603 = vmatpush1.bf16.msra.mxu0 0
        %1604 = vmatprep.mubr.bf16.mxu0 0
        %1605 = vmatmul.mubr.bf16.gmra.mrb[0].mxu0 %v1517
        %v1606 = vpop.f32.mrb[0].mxu0
        %v1607 = vadd.f32 0.0, %v1606
        %v1608 = vpop.f32.mrb[0].mxu0
        %v1609 = vadd.f32 0.0, %v1608
        %v1610 = vpop.f32.mrb[0].mxu0
        %v1611 = vpop.f32.mrb[0].mxu0
        %1612 = vdwg.mxu0
        %v1614 = vsel %vm454, %v406, 0
        %v1617 = vsel %vm458, %v1496, 0
        %v1620 = vsel %vm458, %v1497, 0
        %v1623 = vsel %vm458, %v1498, 0
        %v1626 = vsel %vm458, %v1499, 0
        %1628 = vmatprep.subr.bf16.mxu0 %v1620
        %1629 = vmatpush1.bf16.msra.mxu0 %v1617
        %1630 = vmatprep.subr.bf16.mxu0 0
        %1631 = vmatpush1.bf16.msra.mxu0 0
        %1632 = vmatprep.subr.bf16.mxu0 0
        %1633 = vmatpush1.bf16.msra.mxu0 0
        %1634 = vmatprep.subr.bf16.mxu0 0
        %1635 = vmatpush1.bf16.msra.mxu0 0
        %1636 = vmatprep.subr.bf16.mxu0 0
        %1637 = vmatpush1.bf16.msra.mxu0 0
        %1638 = vmatprep.subr.bf16.mxu0 0
        %1639 = vmatpush1.bf16.msra.mxu0 0
        %1640 = vmatprep.subr.bf16.mxu0 0
        %1641 = vmatpush1.bf16.msra.mxu0 0
        %1642 = vmatprep.subr.bf16.mxu0 0
        %1643 = vmatpush1.bf16.msra.mxu0 0
        %1644 = vmatprep.subr.bf16.mxu0 0
        %1645 = vmatpush1.bf16.msra.mxu0 0
        %1646 = vmatprep.subr.bf16.mxu0 0
        %1647 = vmatpush1.bf16.msra.mxu0 0
        %1648 = vmatprep.subr.bf16.mxu0 0
        %1649 = vmatpush1.bf16.msra.mxu0 0
        %1650 = vmatprep.subr.bf16.mxu0 0
        %1651 = vmatpush1.bf16.msra.mxu0 0
        %1652 = vmatprep.subr.bf16.mxu0 0
        %1653 = vmatpush1.bf16.msra.mxu0 0
        %1654 = vmatprep.subr.bf16.mxu0 0
        %1655 = vmatpush1.bf16.msra.mxu0 0
        %1656 = vmatprep.subr.bf16.mxu0 0
        %1657 = vmatpush1.bf16.msra.mxu0 0
        %1658 = vmatprep.subr.bf16.mxu0 0
        %1659 = vmatpush1.bf16.msra.mxu0 0
        %1660 = vmatprep.mubr.bf16.mxu0 0
        %1661 = vmatmul.mubr.bf16.gmra.mrb[0].mxu0 %v1614
        %v1662 = vpop.f32.mrb[0].mxu0
        %v1663 = vadd.f32 %v1566, %v1662
        %v1664 = vpop.f32.mrb[0].mxu0
        %v1665 = vadd.f32 %v1568, %v1664
        %v1666 = vpop.f32.mrb[0].mxu0
        %v1667 = vpop.f32.mrb[0].mxu0
        %1668 = vdwg.mxu0
        %1669 = vmatprep.subr.bf16.mxu0 %v1626
        %1670 = vmatpush1.bf16.msra.mxu0 %v1623
        %1671 = vmatprep.subr.bf16.mxu0 0
        %1672 = vmatpush1.bf16.msra.mxu0 0
        %1673 = vmatprep.subr.bf16.mxu0 0
        %1674 = vmatpush1.bf16.msra.mxu0 0
        %1675 = vmatprep.subr.bf16.mxu0 0
        %1676 = vmatpush1.bf16.msra.mxu0 0
        %1677 = vmatprep.subr.bf16.mxu0 0
        %1678 = vmatpush1.bf16.msra.mxu0 0
        %1679 = vmatprep.subr.bf16.mxu0 0
        %1680 = vmatpush1.bf16.msra.mxu0 0
        %1681 = vmatprep.subr.bf16.mxu0 0
        %1682 = vmatpush1.bf16.msra.mxu0 0
        %1683 = vmatprep.subr.bf16.mxu0 0
        %1684 = vmatpush1.bf16.msra.mxu0 0
        %1685 = vmatprep.subr.bf16.mxu0 0
        %1686 = vmatpush1.bf16.msra.mxu0 0
        %1687 = vmatprep.subr.bf16.mxu0 0
        %1688 = vmatpush1.bf16.msra.mxu0 0
        %1689 = vmatprep.subr.bf16.mxu0 0
        %1690 = vmatpush1.bf16.msra.mxu0 0
        %1691 = vmatprep.subr.bf16.mxu0 0
        %1692 = vmatpush1.bf16.msra.mxu0 0
        %1693 = vmatprep.subr.bf16.mxu0 0
        %1694 = vmatpush1.bf16.msra.mxu0 0
        %1695 = vmatprep.subr.bf16.mxu0 0
        %1696 = vmatpush1.bf16.msra.mxu0 0
        %1697 = vmatprep.subr.bf16.mxu0 0
        %1698 = vmatpush1.bf16.msra.mxu0 0
        %1699 = vmatprep.subr.bf16.mxu0 0
        %1700 = vmatpush1.bf16.msra.mxu0 0
        %1701 = vmatprep.mubr.bf16.mxu0 0
        %1702 = vmatmul.mubr.bf16.gmra.mrb[0].mxu0 %v1614
        %v1703 = vpop.f32.mrb[0].mxu0
        %v1704 = vadd.f32 %v1607, %v1703
        %v1705 = vpop.f32.mrb[0].mxu0
        %v1706 = vadd.f32 %v1609, %v1705
        %v1707 = vpop.f32.mrb[0].mxu0
        %v1708 = vpop.f32.mrb[0].mxu0
        %1709 = vdwg.mxu0
        %1710 = vrot.lane.b32.xlu0 %v1492, 108
        %v1711 = vpop.permute.xlu0 %1710
        %1712 = vrot.lane.b32.xlu0 %v1493, 108
        %v1713 = vpop.permute.xlu0 %1712
        %1714 = vrot.lane.b32.xlu0 %v1494, 108
        %v1715 = vpop.permute.xlu0 %1714
        %1716 = vrot.lane.b32.xlu0 %v1495, 108
        %v1717 = vpop.permute.xlu0 %1716
        %v1718 = vsel %vm658, %v1715, %v1717
        %v1719 = vsel %vm658, %v1713, %v1715
        %v1720 = vsel %vm658, %v1711, %v1713
        %v1721 = vsel %vm658, %v1717, %v1711
        %v1722 = vpack.c.bf16 %v1720, %v1720
        %v1723 = vpack.c.bf16 %v1719, %v1719
        %v1724 = vpack.c.bf16 %v1718, %v1718
        %v1725 = vpack.c.bf16 %v1721, %v1721
        %v1727 = vsel %vm454, %v407, 0
        %v1730 = vsel %vm458, %v1722, 0
        %v1733 = vsel %vm458, %v1723, 0
        %v1736 = vsel %vm458, %v1724, 0
        %v1739 = vsel %vm458, %v1725, 0
        %1741 = vmatprep.subr.bf16.mxu0 %v1733
        %1742 = vmatpush1.bf16.msra.mxu0 %v1730
        %1743 = vmatprep.subr.bf16.mxu0 0
        %1744 = vmatpush1.bf16.msra.mxu0 0
        %1745 = vmatprep.subr.bf16.mxu0 0
        %1746 = vmatpush1.bf16.msra.mxu0 0
        %1747 = vmatprep.subr.bf16.mxu0 0
        %1748 = vmatpush1.bf16.msra.mxu0 0
        %1749 = vmatprep.subr.bf16.mxu0 0
        %1750 = vmatpush1.bf16.msra.mxu0 0
        %1751 = vmatprep.subr.bf16.mxu0 0
        %1752 = vmatpush1.bf16.msra.mxu0 0
        %1753 = vmatprep.subr.bf16.mxu0 0
        %1754 = vmatpush1.bf16.msra.mxu0 0
        %1755 = vmatprep.subr.bf16.mxu0 0
        %1756 = vmatpush1.bf16.msra.mxu0 0
        %1757 = vmatprep.subr.bf16.mxu0 0
        %1758 = vmatpush1.bf16.msra.mxu0 0
        %1759 = vmatprep.subr.bf16.mxu0 0
        %1760 = vmatpush1.bf16.msra.mxu0 0
        %1761 = vmatprep.subr.bf16.mxu0 0
        %1762 = vmatpush1.bf16.msra.mxu0 0
        %1763 = vmatprep.subr.bf16.mxu0 0
        %1764 = vmatpush1.bf16.msra.mxu0 0
        %1765 = vmatprep.subr.bf16.mxu0 0
        %1766 = vmatpush1.bf16.msra.mxu0 0
        %1767 = vmatprep.subr.bf16.mxu0 0
        %1768 = vmatpush1.bf16.msra.mxu0 0
        %1769 = vmatprep.subr.bf16.mxu0 0
        %1770 = vmatpush1.bf16.msra.mxu0 0
        %1771 = vmatprep.subr.bf16.mxu0 0
        %1772 = vmatpush1.bf16.msra.mxu0 0
        %1773 = vmatprep.mubr.bf16.mxu0 0
        %1774 = vmatmul.mubr.bf16.gmra.mrb[0].mxu0 %v1727
        %v1775 = vpop.f32.mrb[0].mxu0
        %v1776 = vadd.f32 0.0, %v1775
        %v1777 = vpop.f32.mrb[0].mxu0
        %v1778 = vadd.f32 0.0, %v1777
        %v1779 = vpop.f32.mrb[0].mxu0
        %v1780 = vpop.f32.mrb[0].mxu0
        %1781 = vdwg.mxu0
        %1782 = vmatprep.subr.bf16.mxu0 %v1739
        %1783 = vmatpush1.bf16.msra.mxu0 %v1736
        %1784 = vmatprep.subr.bf16.mxu0 0
        %1785 = vmatpush1.bf16.msra.mxu0 0
        %1786 = vmatprep.subr.bf16.mxu0 0
        %1787 = vmatpush1.bf16.msra.mxu0 0
        %1788 = vmatprep.subr.bf16.mxu0 0
        %1789 = vmatpush1.bf16.msra.mxu0 0
        %1790 = vmatprep.subr.bf16.mxu0 0
        %1791 = vmatpush1.bf16.msra.mxu0 0
        %1792 = vmatprep.subr.bf16.mxu0 0
        %1793 = vmatpush1.bf16.msra.mxu0 0
        %1794 = vmatprep.subr.bf16.mxu0 0
        %1795 = vmatpush1.bf16.msra.mxu0 0
        %1796 = vmatprep.subr.bf16.mxu0 0
        %1797 = vmatpush1.bf16.msra.mxu0 0
        %1798 = vmatprep.subr.bf16.mxu0 0
        %1799 = vmatpush1.bf16.msra.mxu0 0
        %1800 = vmatprep.subr.bf16.mxu0 0
        %1801 = vmatpush1.bf16.msra.mxu0 0
        %1802 = vmatprep.subr.bf16.mxu0 0
        %1803 = vmatpush1.bf16.msra.mxu0 0
        %1804 = vmatprep.subr.bf16.mxu0 0
        %1805 = vmatpush1.bf16.msra.mxu0 0
        %1806 = vmatprep.subr.bf16.mxu0 0
        %1807 = vmatpush1.bf16.msra.mxu0 0
        %1808 = vmatprep.subr.bf16.mxu0 0
        %1809 = vmatpush1.bf16.msra.mxu0 0
        %1810 = vmatprep.subr.bf16.mxu0 0
        %1811 = vmatpush1.bf16.msra.mxu0 0
        %1812 = vmatprep.subr.bf16.mxu0 0
        %1813 = vmatpush1.bf16.msra.mxu0 0
        %1814 = vmatprep.mubr.bf16.mxu0 0
        %1815 = vmatmul.mubr.bf16.gmra.mrb[0].mxu0 %v1727
        %v1816 = vpop.f32.mrb[0].mxu0
        %v1817 = vadd.f32 0.0, %v1816
        %v1818 = vpop.f32.mrb[0].mxu0
        %v1819 = vadd.f32 0.0, %v1818
        %v1820 = vpop.f32.mrb[0].mxu0
        %v1821 = vpop.f32.mrb[0].mxu0
        %1822 = vdwg.mxu0
        %v1823 = vadd.f32 %v1663, %v1776
        %v1824 = vadd.f32 %v1665, %v1778
        %v1825 = vadd.f32 %v1704, %v1817
        %v1826 = vadd.f32 %v1706, %v1819
        %v1827 = vmul.f32 %v1823, %v772
        %v1828 = vmul.f32 %v1824, %v776
        %v1829 = vmul.f32 %v1825, %v780
        %v1830 = vmul.f32 %v1826, %v784
        %v1835 = vcombine.low %v1130, %v1131
        %v1836 = vcombine.low %v1132, %v1133
        %v1838 = vunpack.c.l.s4 1983009808
        %v1839 = vunpack.c.0.s8 %v1838
        %v1840 = vlaneseq
        %v1841 = vshrl.u32 %v1840, 7
        %v1842 = vsub.s32 %v1839, %v1841
        %v1843 = vrot.slane %v1835, %v1842
        %v1845 = vunpack.c.l.s4 1983009808
        %v1846 = vunpack.c.0.s8 %v1845
        %v1847 = vlaneseq
        %v1848 = vshrl.u32 %v1847, 7
        %v1849 = vsub.s32 %v1846, %v1848
        %v1850 = vrot.slane %v1836, %v1849
        %v1851 = vcombine.low %v1843, %v1850
        %1853 = vst [vmem:[%s357] sm:$0xff] %v1851
        %v1858 = vcombine.low %v1827, %v1828
        %v1859 = vcombine.low %v1829, %v1830
        %v1861 = vunpack.c.l.s4 1983009808
        %v1862 = vunpack.c.0.s8 %v1861
        %v1863 = vlaneseq
        %v1864 = vshrl.u32 %v1863, 7
        %v1865 = vsub.s32 %v1862, %v1864
        %v1866 = vrot.slane %v1858, %v1865
        %v1868 = vunpack.c.l.s4 1983009808
        %v1869 = vunpack.c.0.s8 %v1868
        %v1870 = vlaneseq
        %v1871 = vshrl.u32 %v1870, 7
        %v1872 = vsub.s32 %v1869, %v1871
        %v1873 = vrot.slane %v1859, %v1872
        %v1874 = vcombine.low %v1866, %v1873
        %1876 = vst [vmem:[%s364] sm:$0xff] %v1874
        %vm1877 = vcmask 1041408
        %v1878 = vsel %vm1877, %v1130, 0.0
        %v1879 = vsel %vm1877, %v1131, 0.0
        %v1880 = vadd.f32 %v1878, %v1879
        %v1881 = vsel %vm1877, %v1132, 0.0
        %v1882 = vadd.f32 %v1880, %v1881
        %v1883 = vsel %vm1877, %v1133, 0.0
        %v1884 = vadd.f32 %v1882, %v1883
        %1885 = vadd.xlane.f32.xlu0 %v1884
        %v1886 = vpop.xlane.xlu0 %1885
        %vm1887 = vcmask 1024
        %1888 = vst.msk [vmem:[%s371] sm:$0x3] %vm1887, %v1886
        %v1889 = vmul.f32 %v1130, %v1130
        %v1890 = vmul.f32 %v1131, %v1131
        %v1891 = vmul.f32 %v1132, %v1132
        %v1892 = vmul.f32 %v1133, %v1133
        %v1893 = vsel %vm1877, %v1889, 0.0
        %v1894 = vsel %vm1877, %v1890, 0.0
        %v1895 = vadd.f32 %v1893, %v1894
        %v1896 = vsel %vm1877, %v1891, 0.0
        %v1897 = vadd.f32 %v1895, %v1896
        %v1898 = vsel %vm1877, %v1892, 0.0
        %v1899 = vadd.f32 %v1897, %v1898
        %1900 = vadd.xlane.f32.xlu0 %v1899
        %v1901 = vpop.xlane.xlu0 %1900
        %vm1902 = vcmask 9224
        %1903 = vst.msk [vmem:[%s371] sm:$0x3] %vm1902, %v1901
        %v1904 = vsel %vm1877, %v1827, 0.0
        %v1905 = vsel %vm1877, %v1828, 0.0
        %v1906 = vadd.f32 %v1904, %v1905
        %v1907 = vsel %vm1877, %v1829, 0.0
        %v1908 = vadd.f32 %v1906, %v1907
        %v1909 = vsel %vm1877, %v1830, 0.0
        %v1910 = vadd.f32 %v1908, %v1909
        %1911 = vadd.xlane.f32.xlu0 %v1910
        %v1912 = vpop.xlane.xlu0 %1911
        %vm1913 = vcmask 17424
        %1914 = vst.msk [vmem:[%s371] sm:$0x3] %vm1913, %v1912
        %v1915 = vmul.f32 %v1827, %v1827
        %v1916 = vmul.f32 %v1828, %v1828
        %v1917 = vmul.f32 %v1829, %v1829
        %v1918 = vmul.f32 %v1830, %v1830
        %v1919 = vsel %vm1877, %v1915, 0.0
        %v1920 = vsel %vm1877, %v1916, 0.0
        %v1921 = vadd.f32 %v1919, %v1920
        %v1922 = vsel %vm1877, %v1917, 0.0
        %v1923 = vadd.f32 %v1921, %v1922
        %v1924 = vsel %vm1877, %v1918, 0.0
        %v1925 = vadd.f32 %v1923, %v1924
        %1926 = vadd.xlane.f32.xlu0 %v1925
        %v1927 = vpop.xlane.xlu0 %1926
        %vm1928 = vcmask 25624
        %1929 = vst.msk [vmem:[%s371] sm:$0x3] %vm1928, %v1927
        %s1930 = sand.u32 %s193, 1
        %s1931 = scalar_lea.sflag [#allocation4], %s1930
        %s1932 = sand.u32 %s193, 1
        %s1933 = smul.addr %s1932, 8
        %s1934 = scalar_lea.vmem [#allocation5], %s1933
        %s1935 = sand.u32 %s28, 1
        %s1936 = scalar_lea.sflag [#allocation7], %s1935
        %s1937 = sand.u32 %s219, 1
        %s1938 = smul.addr %s1937, 8
        %s1939 = scalar_lea.vmem [#allocation6], %s1938
        %s1940 = sand.u32 %s28, 1
        %s1941 = scalar_lea.sflag [#allocation7], %s1940
        %s1942 = sand.u32 %s245, 1
        %s1943 = smul.addr %s1942, 2
        %s1944 = scalar_lea.vmem [#allocation8], %s1943
        // Predicated region
        $region53: #{tpu_custom_call.1} parent=47 // pred_check
          %p1945 = pneg %p203
        $region54: #{tpu_custom_call.1} parent=47 // pred_check_branch
          %1947 = sbr.rel (%p1945) target = $region56
        $region55: #{tpu_custom_call.1} parent=47 // pred_region
          %s1949 = ssub.s32 128, 128
          %1950 = vsyncadd %s1931, %s1949
          %s1951 = smul.addr %s28, 4
          %s1952 = smul.addr %s1951, 32
          %s1953 = scalar_lea.hbm %s7, %s1952
          %s1955 = sshll.u32 %s1934, 4
          %s1956 = int_to_ptr.vmem [resolvable:$true] %s1955
          %1958 = dma.vmem_to_hbm [thread:$0]  %s1956, 128, %s1953, %s1931
        $region56: #{tpu_custom_call.1} parent=47 // pred_fallthru
          _
        // Predicated region
        $region57: #{tpu_custom_call.1} parent=47 // pred_check
          %p1959 = pneg %p229
        $region58: #{tpu_custom_call.1} parent=47 // pred_check_branch
          %1961 = sbr.rel (%p1959) target = $region60
        $region59: #{tpu_custom_call.1} parent=47 // pred_region
          %s1963 = ssub.s32 128, 128
          %1964 = vsyncadd %s1936, %s1963
          %s1965 = smul.addr %s28, 4
          %s1966 = smul.addr %s1965, 32
          %s1967 = scalar_lea.hbm %s8, %s1966
          %s1969 = sshll.u32 %s1939, 4
          %s1970 = int_to_ptr.vmem [resolvable:$true] %s1969
          %1972 = dma.vmem_to_hbm [thread:$0]  %s1970, 128, %s1967, %s1936
        $region60: #{tpu_custom_call.1} parent=47 // pred_fallthru
          _
        // Predicated region
        $region61: #{tpu_custom_call.1} parent=47 // pred_check
          %p1973 = pneg %p255
        $region62: #{tpu_custom_call.1} parent=47 // pred_check_branch
          %1975 = sbr.rel (%p1973) target = $region64
        $region63: #{tpu_custom_call.1} parent=47 // pred_region
          %s1977 = ssub.s32 32, 32
          %1978 = vsyncadd %s1941, %s1977
          %s1979 = smul.addr %s28, 32
          %s1980 = scalar_lea.hbm %s9, %s1979
          %s1982 = sshll.u32 %s1944, 4
          %s1983 = int_to_ptr.vmem [resolvable:$true] %s1982
          %1985 = dma.vmem_to_hbm [thread:$0]  %s1983, 32, %s1980, %s1941
        $region64: #{tpu_custom_call.1} parent=47 // pred_fallthru
          _
      $region48: #{tpu_custom_call.1} parent=5 // pred_fallthru
        _
      %p1986 = scmp.le.s32.totalorder 2, %s23
      // Predicated region
      $region65: #{tpu_custom_call.1} parent=5 // pred_check
        %p1987 = pneg %p1986
      $region66: #{tpu_custom_call.1} parent=5 // pred_check_branch
        %1989 = sbr.rel (%p1987) target = $region68
      $region67: #{tpu_custom_call.1} parent=5 // pred_region
        %s1990 = ssub.s32 %s23, 2
        // Predicated region
        $region69: #{tpu_custom_call.1} parent=67 // pred_check
          %p1991 = pneg %p209
        $region70: #{tpu_custom_call.1} parent=67 // pred_check_branch
          %1993 = sbr.rel (%p1991) target = $region72
        $region71: #{tpu_custom_call.1} parent=67 // pred_region
          %s1994 = sand.u32 %s194, 1
          %s1995 = scalar_lea.sflag [#allocation4], %s1994
          %s1996 = sand.u32 %s194, 1
          %s1997 = smul.addr %s1996, 8
          %s1998 = scalar_lea.vmem [#allocation5], %s1997
          %1999 = dma.done %s1995, 128
        $region72: #{tpu_custom_call.1} parent=67 // pred_fallthru
          _
        // Predicated region
        $region73: #{tpu_custom_call.1} parent=67 // pred_check
          %p2000 = pneg %p235
        $region74: #{tpu_custom_call.1} parent=67 // pred_check_branch
          %2002 = sbr.rel (%p2000) target = $region76
        $region75: #{tpu_custom_call.1} parent=67 // pred_region
          %s2003 = sand.u32 %s29, 1
          %s2004 = scalar_lea.sflag [#allocation7], %s2003
          %s2005 = sand.u32 %s220, 1
          %s2006 = smul.addr %s2005, 8
          %s2007 = scalar_lea.vmem [#allocation6], %s2006
          %2008 = dma.done %s2004, 128
        $region76: #{tpu_custom_call.1} parent=67 // pred_fallthru
          _
        // Predicated region
        $region77: #{tpu_custom_call.1} parent=67 // pred_check
          %p2009 = pneg %p261
        $region78: #{tpu_custom_call.1} parent=67 // pred_check_branch
          %2011 = sbr.rel (%p2009) target = $region80
        $region79: #{tpu_custom_call.1} parent=67 // pred_region
          %s2012 = sand.u32 %s29, 1
          %s2013 = scalar_lea.sflag [#allocation7], %s2012
          %s2014 = sand.u32 %s246, 1
          %s2015 = smul.addr %s2014, 2
          %s2016 = scalar_lea.vmem [#allocation8], %s2015
          %2017 = dma.done %s2013, 32
        $region80: #{tpu_custom_call.1} parent=67 // pred_fallthru
          _
      $region68: #{tpu_custom_call.1} parent=5 // pred_fallthru
        _
    $region6: #{tpu_custom_call.1} parent=1 // loop_footer
      %s27 = sadd.s32 1, %s23
    $region7: #{tpu_custom_call.1} parent=1 // loop_footer_branch
      %22 = sbr.rel target = $region3
    $region8: #{tpu_custom_call.1} parent=1 // loop_exit
      _
    %2018 = vsyncpa [#allocation3], 1
    %s2019 = scalar_lea.sflag [#allocation3], 1
    %2020 = vsyncpa %s2019, 1
    %2021 = vsyncpa [#allocation4], 1
    %s2022 = scalar_lea.sflag [#allocation4], 1
    %2023 = vsyncpa %s2022, 1
    %2024 = vsyncpa [#allocation7], 1
    %s2025 = scalar_lea.sflag [#allocation7], 1
    %2026 = vsyncpa %s2025, 1

</llo_original>
